<compile_context>
chip_gen: v6e
topology: v6e:2x2x1
jax: 0.10.0
libtpu: 0.0.40
codegen_flags: <defaults>
</compile_context>

<pallas_src>
import functools

import jax
import jax.numpy as jnp
from jax.experimental import pallas as pl
from jax.experimental.pallas import tpu as pltpu

_LANE = 128
_BN_EPS = 1e-5


def _round_up(x, m):
    return ((x + m - 1) // m) * m


def _choose_row_tile(Ho, Wo):
    # Aim for ~512 flattened output rows (TR * Wo) per grid step, and keep at
    # least two row tiles per image when possible so the pipeline has steps to
    # overlap DMA with compute.
    cap = max(1, 512 // max(Wo, 1))
    if Ho >= 2:
        cap = min(cap, max(1, Ho // 2))
    tr = 1
    for t in range(1, Ho + 1):
        if t <= cap and Ho % t == 0:
            tr = t
    return tr


# ---------------------------------------------------------------------------
# Fused Pallas kernel: expand (1x1) -> depthwise (3x3) -> project (1x1) (+res)
# ---------------------------------------------------------------------------

def _fused_inverted_residual_kernel(*refs, has_expand, use_res, stride,
                                    H, W, TR, TR_in, Wo, hdim_p):
    if has_expand:
        (x_ref, we_ref, be_ref, wdw_ref, bdw_ref, wp_ref, bp_ref,
         o_ref, hbuf) = refs
    else:
        (x_ref, wdw_ref, bdw_ref, wp_ref, bp_ref, o_ref, hbuf) = refs

    r = pl.program_id(1)
    row_start = pl.multiple_of(r * (TR * stride), TR * stride)

    # ---- stage 1: (optional) 1x1 expand + BN + ReLU6, kept in VMEM scratch --
    # x_ref block: (1, H+2, W, Cin_p); rows are H-halo-padded, channels padded.
    xw = x_ref[0, pl.ds(row_start, TR_in), :, :]          # (TR_in, W, Cin_p)
    cin_p = xw.shape[-1]
    if has_expand:
        h = jnp.dot(xw.reshape(TR_in * W, cin_p), we_ref[...],
                    preferred_element_type=jnp.float32)
        h = jnp.clip(h + be_ref[...], 0.0, 6.0).reshape(TR_in, W, hdim_p)
    else:
        h = xw                                            # hdim_p == cin_p

    # Write the expanded tile into VMEM scratch with an explicit zero W-halo.
    zcol = jnp.zeros((TR_in, 1, hdim_p), jnp.float32)
    hbuf[...] = jnp.concatenate([zcol, h, zcol], axis=1)  # (TR_in, W+2, hdim_p)

    if has_expand:
        # Rows that fall in the depthwise zero-padding halo must stay zero
        # (the expand bias would otherwise leak into them).
        @pl.when(row_start == 0)
        def _():
            hbuf[0:1, :, :] = jnp.zeros((1, W + 2, hdim_p), jnp.float32)

        @pl.when(row_start + TR_in == H + 2)
        def _():
            hbuf[TR_in - 1:TR_in, :, :] = jnp.zeros((1, W + 2, hdim_p),
                                                    jnp.float32)

    # ---- stage 2: 3x3 depthwise + BN + ReLU6 (BN scale pre-folded) ----------
    acc = jnp.zeros((TR, Wo, hdim_p), jnp.float32)
    if stride == 1:
        for kh in range(3):
            for kw in range(3):
                tap = wdw_ref[3 * kh + kw:3 * kh + kw + 1, :]   # (1, hdim_p)
                acc = acc + hbuf[kh:kh + TR, kw:kw + Wo, :] * tap
    else:  # stride == 2: even/odd parity split done ONCE, then unit slices.
        hee = hbuf[pl.ds(0, TR + 1, 2), pl.ds(0, Wo + 1, 2), :]
        heo = hbuf[pl.ds(0, TR + 1, 2), pl.ds(1, Wo, 2), :]
        hoe = hbuf[pl.ds(1, TR, 2), pl.ds(0, Wo + 1, 2), :]
        hoo = hbuf[pl.ds(1, TR, 2), pl.ds(1, Wo, 2), :]
        parity = {("e", "e"): hee, ("e", "o"): heo,
                  ("o", "e"): hoe, ("o", "o"): hoo}
        for kh in range(3):
            rk, ro = (("e", kh // 2) if kh % 2 == 0 else ("o", 0))
            for kw in range(3):
                ck, co = (("e", kw // 2) if kw % 2 == 0 else ("o", 0))
                tap = wdw_ref[3 * kh + kw:3 * kh + kw + 1, :]
                acc = acc + parity[(rk, ck)][ro:ro + TR, co:co + Wo, :] * tap
    ydw = jnp.clip(acc + bdw_ref[...], 0.0, 6.0)          # (TR, Wo, hdim_p)

    # ---- stage 3: 1x1 projection + BN (+ residual) ---------------------------
    cout_p = o_ref.shape[-1]
    y = jnp.dot(ydw.reshape(TR * Wo, hdim_p), wp_ref[...],
                preferred_element_type=jnp.float32) + bp_ref[...]
    y = y.reshape(TR, Wo, cout_p)
    if use_res:
        y = y + x_ref[0, pl.ds(r * TR + 1, TR), :, :]     # stride==1, Cin==Cout
    o_ref[0] = y.astype(o_ref.dtype)


def _fused_call(x_pad, weights, *, has_expand, use_res, stride, N, H, W,
                cin_p, hdim_p, cout_p, Ho, Wo, TR):
    Hp = H + 2
    TR_in = (TR - 1) * stride + 3
    kern = functools.partial(
        _fused_inverted_residual_kernel,
        has_expand=has_expand, use_res=use_res, stride=stride,
        H=H, W=W, TR=TR, TR_in=TR_in, Wo=Wo, hdim_p=hdim_p)

    in_specs = [pl.BlockSpec((1, Hp, W, cin_p), lambda n, r: (n, 0, 0, 0))]
    if has_expand:
        in_specs += [pl.BlockSpec((cin_p, hdim_p), lambda n, r: (0, 0)),
                     pl.BlockSpec((1, hdim_p), lambda n, r: (0, 0))]
    in_specs += [pl.BlockSpec((9, hdim_p), lambda n, r: (0, 0)),
                 pl.BlockSpec((1, hdim_p), lambda n, r: (0, 0)),
                 pl.BlockSpec((hdim_p, cout_p), lambda n, r: (0, 0)),
                 pl.BlockSpec((1, cout_p), lambda n, r: (0, 0))]

    # Rough per-step VMEM estimate (double-buffered blocks + scratch + weights),
    # used to pick an explicit, v7x-safe scoped-VMEM limit.
    est = 4 * (2 * Hp * W * cin_p + 2 * TR * Wo * cout_p
               + TR_in * (W + 2) * hdim_p
               + 2 * (cin_p * hdim_p + hdim_p * cout_p
                      + 12 * hdim_p + 2 * cout_p))
    vmem_limit = int(min(max(4 * est, 32 * 2 ** 20), 48 * 2 ** 20))

    return pl.pallas_call(
        kern,
        out_shape=jax.ShapeDtypeStruct((N, Ho, Wo, cout_p), jnp.float32),
        grid=(N, Ho // TR),
        in_specs=in_specs,
        out_specs=pl.BlockSpec((1, TR, Wo, cout_p), lambda n, r: (n, r, 0, 0)),
        scratch_shapes=[pltpu.VMEM((TR_in, W + 2, hdim_p), jnp.float32)],
        compiler_params=pltpu.CompilerParams(
            dimension_semantics=("parallel", "parallel"),
            vmem_limit_bytes=vmem_limit),
    )(x_pad, *weights)


# ---------------------------------------------------------------------------
# Parameters: raw (conv weights + BN stats) and packed (folded + lane-padded)
# ---------------------------------------------------------------------------

def init_residual_params(key, input4, output4, expand_ratio):
    hDim = int(input4 * expand_ratio)
    ks = jax.random.split(key, 16)
    p = {}
    if expand_ratio != 1:
        p["w_expand"] = 0.1 * jax.random.normal(ks[0], (input4, hDim), jnp.float32)
        p["gamma1"] = 1.0 + 0.1 * jax.random.normal(ks[1], (hDim,), jnp.float32)
        p["beta1"] = 0.1 * jax.random.normal(ks[2], (hDim,), jnp.float32)
        p["mean1"] = 0.1 * jax.random.normal(ks[3], (hDim,), jnp.float32)
        p["var1"] = 0.5 + jnp.abs(jax.random.normal(ks[4], (hDim,), jnp.float32))
    p["w_dw"] = 0.1 * jax.random.normal(ks[5], (3, 3, hDim), jnp.float32)
    p["gamma2"] = 1.0 + 0.1 * jax.random.normal(ks[6], (hDim,), jnp.float32)
    p["beta2"] = 0.1 * jax.random.normal(ks[7], (hDim,), jnp.float32)
    p["mean2"] = 0.1 * jax.random.normal(ks[8], (hDim,), jnp.float32)
    p["var2"] = 0.5 + jnp.abs(jax.random.normal(ks[9], (hDim,), jnp.float32))
    p["w_proj"] = 0.1 * jax.random.normal(ks[10], (hDim, output4), jnp.float32)
    p["gamma3"] = 1.0 + 0.1 * jax.random.normal(ks[11], (output4,), jnp.float32)
    p["beta3"] = 0.1 * jax.random.normal(ks[12], (output4,), jnp.float32)
    p["mean3"] = 0.1 * jax.random.normal(ks[13], (output4,), jnp.float32)
    p["var3"] = 0.5 + jnp.abs(jax.random.normal(ks[14], (output4,), jnp.float32))
    return p


def _fold_bn(gamma, beta, mean, var, eps=_BN_EPS):
    scale = gamma / jnp.sqrt(var + eps)
    return scale, beta - mean * scale


def pack_residual_params(params, *, expand_ratio, input4, output4):
    """Fold BN scale into the conv weights and pad channels to 128 lanes."""
    hDim = int(input4 * expand_ratio)
    cin_p = _round_up(input4, _LANE)
    hdim_p = _round_up(hDim, _LANE)
    cout_p = _round_up(output4, _LANE)
    packed = {}
    if expand_ratio != 1:
        s, b = _fold_bn(params["gamma1"], params["beta1"],
                        params["mean1"], params["var1"])
        w = params["w_expand"] * s[None, :]
        packed["w_expand"] = jnp.pad(w, ((0, cin_p - input4), (0, hdim_p - hDim)))
        packed["b_expand"] = jnp.pad(b, (0, hdim_p - hDim))[None, :]
    s, b = _fold_bn(params["gamma2"], params["beta2"],
                    params["mean2"], params["var2"])
    wdw = (params["w_dw"] * s[None, None, :]).reshape(9, hDim)
    packed["w_dw"] = jnp.pad(wdw, ((0, 0), (0, hdim_p - hDim)))
    packed["b_dw"] = jnp.pad(b, (0, hdim_p - hDim))[None, :]
    s, b = _fold_bn(params["gamma3"], params["beta3"],
                    params["mean3"], params["var3"])
    wp = params["w_proj"] * s[None, :]
    packed["w_proj"] = jnp.pad(wp, ((0, hdim_p - hDim), (0, cout_p - output4)))
    packed["b_proj"] = jnp.pad(b, (0, cout_p - output4))[None, :]
    return packed


# ---------------------------------------------------------------------------
# Forward pass (NCHW in / NCHW out, like the PyTorch module)
# ---------------------------------------------------------------------------

def residual_forward(x_nchw, packed, *, stride, expand_ratio, input4, output4):
    assert stride in (1, 2)
    use_res = (stride == 1) and (input4 == output4)
    has_expand = expand_ratio != 1
    hDim = int(input4 * expand_ratio)

    x = jnp.transpose(x_nchw, (0, 2, 3, 1)).astype(jnp.float32)  # NCHW -> NHWC
    N, H, W, Cin = x.shape
    Ho = (H + 2 - 3) // stride + 1
    Wo = (W + 2 - 3) // stride + 1
    cin_p = _round_up(Cin, _LANE)
    hdim_p = _round_up(hDim, _LANE)
    cout_p = _round_up(output4, _LANE)

    # Only the small input gets a 1-row halo + channel padding; the expanded
    # activation never touches HBM.
    x_pad = jnp.pad(x, ((0, 0), (1, 1), (0, 0), (0, cin_p - Cin)))

    TR = _choose_row_tile(Ho, Wo)
    weights = []
    if has_expand:
        weights += [packed["w_expand"], packed["b_expand"]]
    weights += [packed["w_dw"], packed["b_dw"],
                packed["w_proj"], packed["b_proj"]]

    out_p = _fused_call(x_pad, weights, has_expand=has_expand, use_res=use_res,
                        stride=stride, N=N, H=H, W=W, cin_p=cin_p,
                        hdim_p=hdim_p, cout_p=cout_p, Ho=Ho, Wo=Wo, TR=TR)
    out = out_p[..., :output4]
    return jnp.transpose(out, (0, 3, 1, 2))                      # NHWC -> NCHW


# ---------------------------------------------------------------------------
# Pure-JAX reference (uses raw, un-folded params)
# ---------------------------------------------------------------------------

def residual_reference(x_nchw, params, *, stride, expand_ratio, input4, output4):
    use_res = (stride == 1) and (input4 == output4)
    x = jnp.transpose(x_nchw, (0, 2, 3, 1)).astype(jnp.float32)
    h = x
    if expand_ratio != 1:
        s, b = _fold_bn(params["gamma1"], params["beta1"],
                        params["mean1"], params["var1"])
        h = jnp.einsum("nhwc,cd->nhwd", h, params["w_expand"])
        h = jnp.clip(h * s + b, 0.0, 6.0)
    N, H, W, C = h.shape
    Ho = (H + 2 - 3) // stride + 1
    Wo = (W + 2 - 3) // stride + 1
    hp = jnp.pad(h, ((0, 0), (1, 1), (1, 1), (0, 0)))
    acc = jnp.zeros((N, Ho, Wo, C), jnp.float32)
    for kh in range(3):
        for kw in range(3):
            patch = hp[:, kh:kh + (Ho - 1) * stride + 1:stride,
                       kw:kw + (Wo - 1) * stride + 1:stride, :]
            acc = acc + patch * params["w_dw"][kh, kw]
    s, b = _fold_bn(params["gamma2"], params["beta2"],
                    params["mean2"], params["var2"])
    h = jnp.clip(acc * s + b, 0.0, 6.0)
    o = jnp.einsum("nhwc,cd->nhwd", h, params["w_proj"])
    s, b = _fold_bn(params["gamma3"], params["beta3"],
                    params["mean3"], params["var3"])
    o = o * s + b
    if use_res:
        o = o + x
    return jnp.transpose(o, (0, 3, 1, 2))


# ---------------------------------------------------------------------------

if __name__ == "__main__":
    configs = [
        # (input4, output4, stride2, expand_ratio)
        (4, 4, 1, 2),   # residual-connection path (primary test config)
        (4, 8, 2, 2),   # strided, no residual
        (4, 4, 1, 1),   # expand_ratio == 1 path
    ]
    N, H, W = 2, 16, 16
    key = jax.random.PRNGKey(0)

    for idx, (input4, output4, stride2, expand_ratio) in enumerate(configs):
        key, kx, kp = jax.random.split(key, 3)
        x = jax.random.normal(kx, (N, input4, H, W), jnp.float32)   # NCHW
        params = init_residual_params(kp, input4, output4, expand_ratio)
        packed = pack_residual_params(params, expand_ratio=expand_ratio,
                                      input4=input4, output4=output4)

        out = residual_forward(x, packed, stride=stride2,
                               expand_ratio=expand_ratio,
                               input4=input4, output4=output4)
        out = jax.block_until_ready(out)

        ref = residual_reference(x, params, stride=stride2,
                                 expand_ratio=expand_ratio,
                                 input4=input4, output4=output4)
        Ho = (H + 2 - 3) // stride2 + 1
        Wo = (W + 2 - 3) // stride2 + 1
        assert out.shape == (N, output4, Ho, Wo), (idx, out.shape)
        assert jnp.allclose(out, ref, atol=1e-4, rtol=1e-4), (
            f"config {idx}: max abs err {jnp.max(jnp.abs(out - ref))}")

    print("KERNEL_OK")
</pallas_src>

<mosaic_0001>
module attributes {stable_mosaic.version = 11 : i64} {
  func.func @_fused_inverted_residual_kernel(%arg0: i32, %arg1: i32, %arg2: memref<1x18x16x128xf32, #tpu.memory_space<vmem>>, %arg3: memref<128x128xf32, #tpu.memory_space<vmem>>, %arg4: memref<1x128xf32, #tpu.memory_space<vmem>>, %arg5: memref<9x128xf32, #tpu.memory_space<vmem>>, %arg6: memref<1x128xf32, #tpu.memory_space<vmem>>, %arg7: memref<128x128xf32, #tpu.memory_space<vmem>>, %arg8: memref<1x128xf32, #tpu.memory_space<vmem>>, %arg9: memref<1x8x16x128xf32, #tpu.memory_space<vmem>>, %arg10: memref<10x18x128xf32, #tpu.memory_space<vmem>>) attributes {dimension_semantics = [#tpu.dimension_semantics<parallel>, #tpu.dimension_semantics<parallel>], iteration_bounds = array<i64: 2, 2>, scalar_prefetch = 0 : i64, scratch_operands = 1 : i64, tpu.core_type = #tpu.core_type<tc>, window_params = [{transform_indices = @transform_0, window_bounds = array<i64: 1, 18, 16, 128>}, {pipeline_mode = #tpu.pipeline_mode<synchronous>, transform_indices = @transform_1, window_bounds = array<i64: 128, 128>}, {pipeline_mode = #tpu.pipeline_mode<synchronous>, transform_indices = @transform_2, window_bounds = array<i64: 1, 128>}, {pipeline_mode = #tpu.pipeline_mode<synchronous>, transform_indices = @transform_3, window_bounds = array<i64: 9, 128>}, {pipeline_mode = #tpu.pipeline_mode<synchronous>, transform_indices = @transform_4, window_bounds = array<i64: 1, 128>}, {pipeline_mode = #tpu.pipeline_mode<synchronous>, transform_indices = @transform_5, window_bounds = array<i64: 128, 128>}, {pipeline_mode = #tpu.pipeline_mode<synchronous>, transform_indices = @transform_6, window_bounds = array<i64: 1, 128>}, {transform_indices = @transform_7, window_bounds = array<i64: 1, 8, 16, 128>}]} {
    %c8_i32 = arith.constant 8 : i32
    %0 = arith.muli %arg1, %c8_i32 : i32
    %1 = tpu.assume_multiple %0, 8 : i32
    %c0 = arith.constant 0 : index
    %2 = arith.index_cast %1 : i32 to index
    %c0_0 = arith.constant 0 : index
    %c0_1 = arith.constant 0 : index
    %3 = vector.load %arg2[%c0, %2, %c0_0, %c0_1] : memref<1x18x16x128xf32, #tpu.memory_space<vmem>>, vector<1x10x16x128xf32>
    %4 = vector.shape_cast %3 : vector<1x10x16x128xf32> to vector<10x16x128xf32>
    %5 = vector.shape_cast %4 : vector<10x16x128xf32> to vector<160x128xf32>
    %c0_2 = arith.constant 0 : index
    %c0_3 = arith.constant 0 : index
    %6 = vector.load %arg3[%c0_2, %c0_3] : memref<128x128xf32, #tpu.memory_space<vmem>>, vector<128x128xf32>
    %cst = arith.constant dense<0.000000e+00> : vector<160x128xf32>
    %7 = tpu.matmul %5, %6, %cst {dimension_numbers = #tpu.dot_dimension_numbers<[1], [0], [0], [1], [0, 0, 1, 1], [], []>} : vector<160x128xf32>, vector<128x128xf32>, vector<160x128xf32> -> vector<160x128xf32>
    %c0_4 = arith.constant 0 : index
    %c0_5 = arith.constant 0 : index
    %8 = vector.load %arg4[%c0_4, %c0_5] : memref<1x128xf32, #tpu.memory_space<vmem>>, vector<1x128xf32>
    %9 = vector.broadcast %8 : vector<1x128xf32> to vector<160x128xf32>
    %10 = arith.addf %7, %9 : vector<160x128xf32>
    %cst_6 = arith.constant 0.000000e+00 : f32
    %cst_7 = arith.constant 6.000000e+00 : f32
    %11 = vector.broadcast %cst_6 : f32 to vector<160x128xf32>
    %12 = arith.maximumf %11, %10 : vector<160x128xf32>
    %13 = vector.broadcast %cst_7 : f32 to vector<160x128xf32>
    %14 = arith.minimumf %13, %12 : vector<160x128xf32>
    %15 = vector.shape_cast %14 : vector<160x128xf32> to vector<10x16x128xf32>
    %cst_8 = arith.constant 0.000000e+00 : f32
    %16 = vector.broadcast %cst_8 : f32 to vector<10x1x128xf32>
    %17 = tpu.concatenate %16, %15, %16 in 1 : vector<10x1x128xf32>, vector<10x16x128xf32>, vector<10x1x128xf32> -> vector<10x18x128xf32>
    %c0_9 = arith.constant 0 : index
    %c0_10 = arith.constant 0 : index
    %c0_11 = arith.constant 0 : index
    %18 = vector.load %arg10[%c0_9, %c0_10, %c0_11] : memref<10x18x128xf32, #tpu.memory_space<vmem>>, vector<10x18x128xf32>
    tpu.vector_store %arg10[%c0_9, %c0_10, %c0_11], %17 {strides = array<i32>} : memref<10x18x128xf32, #tpu.memory_space<vmem>>, vector<10x18x128xf32>,
    %c0_i32 = arith.constant 0 : i32
    %19 = arith.cmpi eq, %1, %c0_i32 : i32
    %20 = arith.extui %19 : i1 to i32
    %c0_i32_12 = arith.constant 0 : i32
    %21 = arith.cmpi ne, %20, %c0_i32_12 : i32
    scf.if %21 {
      %cst_69 = arith.constant 0.000000e+00 : f32
      %105 = vector.broadcast %cst_69 : f32 to vector<1x18x128xf32>
      %c0_70 = arith.constant 0 : index
      %c0_71 = arith.constant 0 : index
      %c0_72 = arith.constant 0 : index
      %106 = vector.load %arg10[%c0_70, %c0_71, %c0_72] : memref<10x18x128xf32, #tpu.memory_space<vmem>>, vector<1x18x128xf32>
      tpu.vector_store %arg10[%c0_70, %c0_71, %c0_72], %105 {strides = array<i32>} : memref<10x18x128xf32, #tpu.memory_space<vmem>>, vector<1x18x128xf32>,
    } else {
    }
    %c10_i32 = arith.constant 10 : i32
    %22 = arith.addi %1, %c10_i32 : i32
    %c18_i32 = arith.constant 18 : i32
    %23 = arith.cmpi eq, %22, %c18_i32 : i32
    %24 = arith.extui %23 : i1 to i32
    %c0_i32_13 = arith.constant 0 : i32
    %25 = arith.cmpi ne, %24, %c0_i32_13 : i32
    scf.if %25 {
      %cst_69 = arith.constant 0.000000e+00 : f32
      %105 = vector.broadcast %cst_69 : f32 to vector<1x18x128xf32>
      %c9 = arith.constant 9 : index
      %c0_70 = arith.constant 0 : index
      %c0_71 = arith.constant 0 : index
      %106 = vector.load %arg10[%c9, %c0_70, %c0_71] : memref<10x18x128xf32, #tpu.memory_space<vmem>>, vector<1x18x128xf32>
      tpu.vector_store %arg10[%c9, %c0_70, %c0_71], %105 {strides = array<i32>} : memref<10x18x128xf32, #tpu.memory_space<vmem>>, vector<1x18x128xf32>,
    } else {
    }
    %cst_14 = arith.constant 0.000000e+00 : f32
    %26 = vector.broadcast %cst_14 : f32 to vector<8x16x128xf32>
    %c0_15 = arith.constant 0 : index
    %c0_16 = arith.constant 0 : index
    %27 = vector.load %arg5[%c0_15, %c0_16] : memref<9x128xf32, #tpu.memory_space<vmem>>, vector<1x128xf32>
    %c0_17 = arith.constant 0 : index
    %c0_18 = arith.constant 0 : index
    %c0_19 = arith.constant 0 : index
    %28 = vector.load %arg10[%c0_17, %c0_18, %c0_19] : memref<10x18x128xf32, #tpu.memory_space<vmem>>, vector<8x16x128xf32>
    %29 = vector.shape_cast %27 : vector<1x128xf32> to vector<1x1x128xf32>
    %30 = vector.broadcast %29 : vector<1x1x128xf32> to vector<8x16x128xf32>
    %31 = arith.mulf %28, %30 : vector<8x16x128xf32>
    %32 = arith.addf %26, %31 : vector<8x16x128xf32>
    %c1 = arith.constant 1 : index
    %c0_20 = arith.constant 0 : index
    %33 = vector.load %arg5[%c1, %c0_20] : memref<9x128xf32, #tpu.memory_space<vmem>>, vector<1x128xf32>
    %c0_21 = arith.constant 0 : index
    %c1_22 = arith.constant 1 : index
    %c0_23 = arith.constant 0 : index
    %34 = vector.load %arg10[%c0_21, %c1_22, %c0_23] : memref<10x18x128xf32, #tpu.memory_space<vmem>>, vector<8x16x128xf32>
    %35 = vector.shape_cast %33 : vector<1x128xf32> to vector<1x1x128xf32>
    %36 = vector.broadcast %35 : vector<1x1x128xf32> to vector<8x16x128xf32>
    %37 = arith.mulf %34, %36 : vector<8x16x128xf32>
    %38 = arith.addf %32, %37 : vector<8x16x128xf32>
    %c2 = arith.constant 2 : index
    %c0_24 = arith.constant 0 : index
    %39 = vector.load %arg5[%c2, %c0_24] : memref<9x128xf32, #tpu.memory_space<vmem>>, vector<1x128xf32>
    %c0_25 = arith.constant 0 : index
    %c2_26 = arith.constant 2 : index
    %c0_27 = arith.constant 0 : index
    %40 = vector.load %arg10[%c0_25, %c2_26, %c0_27] : memref<10x18x128xf32, #tpu.memory_space<vmem>>, vector<8x16x128xf32>
    %41 = vector.shape_cast %39 : vector<1x128xf32> to vector<1x1x128xf32>
    %42 = vector.broadcast %41 : vector<1x1x128xf32> to vector<8x16x128xf32>
    %43 = arith.mulf %40, %42 : vector<8x16x128xf32>
    %44 = arith.addf %38, %43 : vector<8x16x128xf32>
    %c3 = arith.constant 3 : index
    %c0_28 = arith.constant 0 : index
    %45 = vector.load %arg5[%c3, %c0_28] : memref<9x128xf32, #tpu.memory_space<vmem>>, vector<1x128xf32>
    %c1_29 = arith.constant 1 : index
    %c0_30 = arith.constant 0 : index
    %c0_31 = arith.constant 0 : index
    %46 = vector.load %arg10[%c1_29, %c0_30, %c0_31] : memref<10x18x128xf32, #tpu.memory_space<vmem>>, vector<8x16x128xf32>
    %47 = vector.shape_cast %45 : vector<1x128xf32> to vector<1x1x128xf32>
    %48 = vector.broadcast %47 : vector<1x1x128xf32> to vector<8x16x128xf32>
    %49 = arith.mulf %46, %48 : vector<8x16x128xf32>
    %50 = arith.addf %44, %49 : vector<8x16x128xf32>
    %c4 = arith.constant 4 : index
    %c0_32 = arith.constant 0 : index
    %51 = vector.load %arg5[%c4, %c0_32] : memref<9x128xf32, #tpu.memory_space<vmem>>, vector<1x128xf32>
    %c1_33 = arith.constant 1 : index
    %c1_34 = arith.constant 1 : index
    %c0_35 = arith.constant 0 : index
    %52 = vector.load %arg10[%c1_33, %c1_34, %c0_35] : memref<10x18x128xf32, #tpu.memory_space<vmem>>, vector<8x16x128xf32>
    %53 = vector.shape_cast %51 : vector<1x128xf32> to vector<1x1x128xf32>
    %54 = vector.broadcast %53 : vector<1x1x128xf32> to vector<8x16x128xf32>
    %55 = arith.mulf %52, %54 : vector<8x16x128xf32>
    %56 = arith.addf %50, %55 : vector<8x16x128xf32>
    %c5 = arith.constant 5 : index
    %c0_36 = arith.constant 0 : index
    %57 = vector.load %arg5[%c5, %c0_36] : memref<9x128xf32, #tpu.memory_space<vmem>>, vector<1x128xf32>
    %c1_37 = arith.constant 1 : index
    %c2_38 = arith.constant 2 : index
    %c0_39 = arith.constant 0 : index
    %58 = vector.load %arg10[%c1_37, %c2_38, %c0_39] : memref<10x18x128xf32, #tpu.memory_space<vmem>>, vector<8x16x128xf32>
    %59 = vector.shape_cast %57 : vector<1x128xf32> to vector<1x1x128xf32>
    %60 = vector.broadcast %59 : vector<1x1x128xf32> to vector<8x16x128xf32>
    %61 = arith.mulf %58, %60 : vector<8x16x128xf32>
    %62 = arith.addf %56, %61 : vector<8x16x128xf32>
    %c6 = arith.constant 6 : index
    %c0_40 = arith.constant 0 : index
    %63 = vector.load %arg5[%c6, %c0_40] : memref<9x128xf32, #tpu.memory_space<vmem>>, vector<1x128xf32>
    %c2_41 = arith.constant 2 : index
    %c0_42 = arith.constant 0 : index
    %c0_43 = arith.constant 0 : index
    %64 = vector.load %arg10[%c2_41, %c0_42, %c0_43] : memref<10x18x128xf32, #tpu.memory_space<vmem>>, vector<8x16x128xf32>
    %65 = vector.shape_cast %63 : vector<1x128xf32> to vector<1x1x128xf32>
    %66 = vector.broadcast %65 : vector<1x1x128xf32> to vector<8x16x128xf32>
    %67 = arith.mulf %64, %66 : vector<8x16x128xf32>
    %68 = arith.addf %62, %67 : vector<8x16x128xf32>
    %c7 = arith.constant 7 : index
    %c0_44 = arith.constant 0 : index
    %69 = vector.load %arg5[%c7, %c0_44] : memref<9x128xf32, #tpu.memory_space<vmem>>, vector<1x128xf32>
    %c2_45 = arith.constant 2 : index
    %c1_46 = arith.constant 1 : index
    %c0_47 = arith.constant 0 : index
    %70 = vector.load %arg10[%c2_45, %c1_46, %c0_47] : memref<10x18x128xf32, #tpu.memory_space<vmem>>, vector<8x16x128xf32>
    %71 = vector.shape_cast %69 : vector<1x128xf32> to vector<1x1x128xf32>
    %72 = vector.broadcast %71 : vector<1x1x128xf32> to vector<8x16x128xf32>
    %73 = arith.mulf %70, %72 : vector<8x16x128xf32>
    %74 = arith.addf %68, %73 : vector<8x16x128xf32>
    %c8 = arith.constant 8 : index
    %c0_48 = arith.constant 0 : index
    %75 = vector.load %arg5[%c8, %c0_48] : memref<9x128xf32, #tpu.memory_space<vmem>>, vector<1x128xf32>
    %c2_49 = arith.constant 2 : index
    %c2_50 = arith.constant 2 : index
    %c0_51 = arith.constant 0 : index
    %76 = vector.load %arg10[%c2_49, %c2_50, %c0_51] : memref<10x18x128xf32, #tpu.memory_space<vmem>>, vector<8x16x128xf32>
    %77 = vector.shape_cast %75 : vector<1x128xf32> to vector<1x1x128xf32>
    %78 = vector.broadcast %77 : vector<1x1x128xf32> to vector<8x16x128xf32>
    %79 = arith.mulf %76, %78 : vector<8x16x128xf32>
    %80 = arith.addf %74, %79 : vector<8x16x128xf32>
    %c0_52 = arith.constant 0 : index
    %c0_53 = arith.constant 0 : index
    %81 = vector.load %arg6[%c0_52, %c0_53] : memref<1x128xf32, #tpu.memory_space<vmem>>, vector<1x128xf32>
    %82 = vector.shape_cast %81 : vector<1x128xf32> to vector<1x1x128xf32>
    %83 = vector.broadcast %82 : vector<1x1x128xf32> to vector<8x16x128xf32>
    %84 = arith.addf %80, %83 : vector<8x16x128xf32>
    %cst_54 = arith.constant 0.000000e+00 : f32
    %cst_55 = arith.constant 6.000000e+00 : f32
    %85 = vector.broadcast %cst_54 : f32 to vector<8x16x128xf32>
    %86 = arith.maximumf %85, %84 : vector<8x16x128xf32>
    %87 = vector.broadcast %cst_55 : f32 to vector<8x16x128xf32>
    %88 = arith.minimumf %87, %86 : vector<8x16x128xf32>
    %89 = vector.shape_cast %88 : vector<8x16x128xf32> to vector<128x128xf32>
    %c0_56 = arith.constant 0 : index
    %c0_57 = arith.constant 0 : index
    %90 = vector.load %arg7[%c0_56, %c0_57] : memref<128x128xf32, #tpu.memory_space<vmem>>, vector<128x128xf32>
    %cst_58 = arith.constant dense<0.000000e+00> : vector<128x128xf32>
    %91 = tpu.matmul %89, %90, %cst_58 {dimension_numbers = #tpu.dot_dimension_numbers<[1], [0], [0], [1], [0, 0, 1, 1], [], []>} : vector<128x128xf32>, vector<128x128xf32>, vector<128x128xf32> -> vector<128x128xf32>
    %c0_59 = arith.constant 0 : index
    %c0_60 = arith.constant 0 : index
    %92 = vector.load %arg8[%c0_59, %c0_60] : memref<1x128xf32, #tpu.memory_space<vmem>>, vector<1x128xf32>
    %93 = vector.broadcast %92 : vector<1x128xf32> to vector<128x128xf32>
    %94 = arith.addf %91, %93 : vector<128x128xf32>
    %95 = vector.shape_cast %94 : vector<128x128xf32> to vector<8x16x128xf32>
    %c8_i32_61 = arith.constant 8 : i32
    %96 = arith.muli %arg1, %c8_i32_61 : i32
    %c1_i32 = arith.constant 1 : i32
    %97 = arith.addi %96, %c1_i32 : i32
    %c0_62 = arith.constant 0 : index
    %98 = arith.index_cast %97 : i32 to index
    %c0_63 = arith.constant 0 : index
    %c0_64 = arith.constant 0 : index
    %99 = vector.load %arg2[%c0_62, %98, %c0_63, %c0_64] : memref<1x18x16x128xf32, #tpu.memory_space<vmem>>, vector<1x8x16x128xf32>
    %100 = vector.shape_cast %99 : vector<1x8x16x128xf32> to vector<8x16x128xf32>
    %101 = arith.addf %95, %100 : vector<8x16x128xf32>
    %c0_65 = arith.constant 0 : index
    %c0_66 = arith.constant 0 : index
    %c0_67 = arith.constant 0 : index
    %c0_68 = arith.constant 0 : index
    %102 = vector.load %arg9[%c0_65, %c0_66, %c0_67, %c0_68] : memref<1x8x16x128xf32, #tpu.memory_space<vmem>>, vector<1x8x16x128xf32>
    %103 = vector.shape_cast %102 : vector<1x8x16x128xf32> to vector<8x16x128xf32>
    %104 = vector.shape_cast %101 : vector<8x16x128xf32> to vector<1x8x16x128xf32>
    tpu.vector_store %arg9[%c0_65, %c0_66, %c0_67, %c0_68], %104 {strides = array<i32>} : memref<1x8x16x128xf32, #tpu.memory_space<vmem>>, vector<1x8x16x128xf32>,
    return
  }
  func.func @transform_0(%arg0: i32, %arg1: i32) -> (i32, i32, i32, i32) {
    %c0_i32 = arith.constant 0 : i32
    %c0_i32_0 = arith.constant 0 : i32
    %c0_i32_1 = arith.constant 0 : i32
    %c0_i32_2 = arith.constant 0 : i32
    return %arg0, %c0_i32, %c0_i32_0, %c0_i32_1 : i32, i32, i32, i32
  }
  func.func @transform_1(%arg0: i32, %arg1: i32) -> (i32, i32) {
    %c0_i32 = arith.constant 0 : i32
    %c0_i32_0 = arith.constant 0 : i32
    %c0_i32_1 = arith.constant 0 : i32
    return %c0_i32, %c0_i32_0 : i32, i32
  }
  func.func @transform_2(%arg0: i32, %arg1: i32) -> (i32, i32) {
    %c0_i32 = arith.constant 0 : i32
    %c0_i32_0 = arith.constant 0 : i32
    %c0_i32_1 = arith.constant 0 : i32
    return %c0_i32, %c0_i32_0 : i32, i32
  }
  func.func @transform_3(%arg0: i32, %arg1: i32) -> (i32, i32) {
    %c0_i32 = arith.constant 0 : i32
    %c0_i32_0 = arith.constant 0 : i32
    %c0_i32_1 = arith.constant 0 : i32
    return %c0_i32, %c0_i32_0 : i32, i32
  }
  func.func @transform_4(%arg0: i32, %arg1: i32) -> (i32, i32) {
    %c0_i32 = arith.constant 0 : i32
    %c0_i32_0 = arith.constant 0 : i32
    %c0_i32_1 = arith.constant 0 : i32
    return %c0_i32, %c0_i32_0 : i32, i32
  }
  func.func @transform_5(%arg0: i32, %arg1: i32) -> (i32, i32) {
    %c0_i32 = arith.constant 0 : i32
    %c0_i32_0 = arith.constant 0 : i32
    %c0_i32_1 = arith.constant 0 : i32
    return %c0_i32, %c0_i32_0 : i32, i32
  }
  func.func @transform_6(%arg0: i32, %arg1: i32) -> (i32, i32) {
    %c0_i32 = arith.constant 0 : i32
    %c0_i32_0 = arith.constant 0 : i32
    %c0_i32_1 = arith.constant 0 : i32
    return %c0_i32, %c0_i32_0 : i32, i32
  }
  func.func @transform_7(%arg0: i32, %arg1: i32) -> (i32, i32, i32, i32) {
    %c0_i32 = arith.constant 0 : i32
    %c0_i32_0 = arith.constant 0 : i32
    %c0_i32_1 = arith.constant 0 : i32
    return %arg0, %arg1, %c0_i32, %c0_i32_0 : i32, i32, i32, i32
  }
}

</mosaic_0001>

<llo_original>
// kernel: tpu_custom_call.1
$region0: #{tpu_custom_call.1}
  #allocation0 [shape = 'u32[]', space=smem, size = 0x4, offset = 0x4, fixed_abs, tag = 'smem constant byte address 0x4 - core index']
  #allocation1 [shape = 'u32[144,128]{1,0:T(1,128)}', space=vmem, size = 0x12000, scoped, tag = 'internal scratch']
  #allocation2 [shape = 'f32[10,18,128]{2,1,0:T(8,128)}', space=vmem, size = 0x1e000, scoped, tag = 'scratch operand']
  %s0 = inlined_call_operand.hbm [shape: f32[2,18,16,128], index: 0, kind: input, shape index: {}]
  %s1 = inlined_call_operand.hbm [shape: f32[128,128], index: 1, kind: input, shape index: {}]
  %s2 = inlined_call_operand.vmem [shape: f32[1,128], index: 2, kind: input, shape index: {}]
  %s3 = inlined_call_operand.hbm [shape: f32[9,128], index: 3, kind: input, shape index: {}]
  %s4 = inlined_call_operand.vmem [shape: f32[1,128], index: 4, kind: input, shape index: {}]
  %s5 = inlined_call_operand.hbm [shape: f32[128,128], index: 5, kind: input, shape index: {}]
  %s6 = inlined_call_operand.vmem [shape: f32[1,128], index: 6, kind: input, shape index: {}]
  %s7 = inlined_call_operand.hbm [shape: f32[2,16,16,128], index: 7, kind: output, shape index: {}]
  %s8 = sld [smem:[#allocation0]]
  $region85: #{tpu_custom_call.1} parent=0
    _
  %s10 = ssub.s32 1, %s8
  %s11 = scalar_select 0, %s10, %s8
  $region1: #{tpu_custom_call.1} parent=0
    #allocation3 [shape = 'u8[294912]{0}', space=vmem, size = 0x48000, scoped, tag = 'input window, operand 0']
    #allocation4 [shape = 's32[2]{0}', space=sflag, size = 0x8, scoped, tag = 'scoped memory for tpu_custom_call.1']
    #allocation5 [shape = 's32[2]{0}', space=sflag, size = 0x8, scoped, tag = 'scoped memory for tpu_custom_call.1']
    #allocation6 [shape = 'u8[65536]{0}', space=vmem, size = 0x10000, scoped, tag = 'input window, operand 1, single buffered']
    #allocation7 [shape = 's32[1]{0}', space=sflag, size = 0x4, scoped, tag = 'scoped memory for tpu_custom_call.1']
    #allocation8 [shape = 'u8[8192]{0}', space=vmem, size = 0x2000, scoped, tag = 'input window, operand 3, single buffered']
    #allocation9 [shape = 'u8[65536]{0}', space=vmem, size = 0x10000, scoped, tag = 'input window, operand 5, single buffered']
    #allocation10 [shape = 's32[1]{0}', space=sflag, size = 0x4, scoped, tag = 'scoped memory for tpu_custom_call.1']
    #allocation11 [shape = 'u8[131072]{0}', space=vmem, size = 0x20000, scoped, tag = 'output window, operand 0']
    %12 = vsyncpa [#allocation4], 0
    %s13 = scalar_lea.sflag [#allocation4], 1
    %14 = vsyncpa %s13, 0
    %15 = vsyncpa [#allocation7], 0
    %16 = vsyncpa [#allocation10], 0
    %17 = vsyncpa [#allocation5], 0
    %s18 = scalar_lea.sflag [#allocation5], 1
    %19 = vsyncpa %s18, 0
    loop: start=0, step=1, limit=6
    $region2: #{tpu_custom_call.1} parent=1 // loop_pre_header
      _
    $region3: #{tpu_custom_call.1} parent=1 // loop_header
      %s21 = sphi 0, %s25
      %p22 = scmp.ge.s32.totalorder %s21, 6
      %s28 = sphi 0, %s40
      %s29 = sphi 0, %s36
      %s30 = sphi 0, %s28
      %s31 = sphi 0, %s29
      %s32 = sphi 0, %s30
      %s33 = sphi 0, %s31
      %s43 = sphi 0, %s45
      %s46 = sphi 0, %s43
      %s47 = sphi 0, %s46
      %s63 = sphi 0, %s47
      %s67 = sphi 0, %s67
      %s69 = sphi 0, %s67
      %s70 = sphi 0, %s69
      %s84 = sphi 0, %s70
      %s88 = sphi 0, %s88
      %s90 = sphi 0, %s88
      %s91 = sphi 0, %s90
      %s105 = sphi 0, %s91
      %s109 = sphi 0, %s109
      %s111 = sphi 0, %s109
      %s112 = sphi 0, %s111
      %s126 = sphi 0, %s112
      %s130 = sphi 0, %s130
      %s132 = sphi 0, %s130
      %s133 = sphi 0, %s132
      %s147 = sphi 0, %s133
      %s151 = sphi 0, %s151
      %s153 = sphi 0, %s151
      %s154 = sphi 0, %s153
      %s168 = sphi 0, %s154
      %s172 = sphi 0, %s172
      %s174 = sphi 0, %s172
      %s175 = sphi 0, %s174
      %s189 = sphi 0, %s175
      %s197 = sphi 0, %s199
      %s200 = sphi 0, %s197
      %s201 = sphi 0, %s200
      %s217 = sphi 0, %s201
    $region4: #{tpu_custom_call.1} parent=1 // loop_header_branch
      %24 = sbr.rel (%p22) target = $region8
    $region5: #{tpu_custom_call.1} parent=1 // loop_body
      %s26 = ssub.s32 %s21, 1
      %s27 = ssub.s32 %s21, 2
      %s34 = sadd.s32 1, %s29
      %p35 = scmp.ge.s32.totalorder %s34, 2
      %s36 = scalar_select %p35, 0, %s34
      %s37 = sadd.s32 1, %s28
      %s38 = scalar_select %p35, %s37, %s28
      %p39 = scmp.ge.s32.totalorder %s38, 2
      %s40 = scalar_select %p39, 0, %s38
      %s41 = ssub.s32 %s28, %s40
      %p42 = scmp.eq.s32.totalorder %s41, 0
      %s44 = sadd.s32 %s43, 1
      %s45 = scalar_select %p42, %s43, %s44
      %p48 = pneg %p42
      %p49 = scmp.eq.s32.totalorder %s21, 3
      %p50 = por %p48, %p49
      %p51 = scmp.ne.s32.totalorder %s43, %s46
      %p52 = scmp.eq.s32.totalorder %s21, 0
      %p53 = por %p51, %p52
      %p54 = scmp.ne.s32.totalorder %s43, %s46
      %p55 = scmp.eq.s32.totalorder %s26, 3
      %p56 = por %p54, %p55
      %p57 = scmp.ne.s32.totalorder %s46, %s47
      %p58 = scmp.eq.s32.totalorder %s26, 0
      %p59 = por %p57, %p58
      %p60 = scmp.ne.s32.totalorder %s46, %s47
      %p61 = scmp.eq.s32.totalorder %s27, 3
      %p62 = por %p60, %p61
      %p64 = scmp.ne.s32.totalorder %s47, %s63
      %p65 = scmp.eq.s32.totalorder %s27, 0
      %p66 = por %p64, %p65
      %s68 = sadd.s32 %s67, 1
      %p71 = scmp.eq.s32.totalorder %s21, 3
      %p72 = scmp.ne.s32.totalorder %s67, %s69
      %p73 = scmp.eq.s32.totalorder %s21, 0
      %p74 = por %p72, %p73
      %p75 = scmp.ne.s32.totalorder %s67, %s69
      %p76 = scmp.eq.s32.totalorder %s26, 3
      %p77 = por %p75, %p76
      %p78 = scmp.ne.s32.totalorder %s69, %s70
      %p79 = scmp.eq.s32.totalorder %s26, 0
      %p80 = por %p78, %p79
      %p81 = scmp.ne.s32.totalorder %s69, %s70
      %p82 = scmp.eq.s32.totalorder %s27, 3
      %p83 = por %p81, %p82
      %p85 = scmp.ne.s32.totalorder %s70, %s84
      %p86 = scmp.eq.s32.totalorder %s27, 0
      %p87 = por %p85, %p86
      %s89 = sadd.s32 %s88, 1
      %p92 = scmp.eq.s32.totalorder %s21, 3
      %p93 = scmp.ne.s32.totalorder %s88, %s90
      %p94 = scmp.eq.s32.totalorder %s21, 0
      %p95 = por %p93, %p94
      %p96 = scmp.ne.s32.totalorder %s88, %s90
      %p97 = scmp.eq.s32.totalorder %s26, 3
      %p98 = por %p96, %p97
      %p99 = scmp.ne.s32.totalorder %s90, %s91
      %p100 = scmp.eq.s32.totalorder %s26, 0
      %p101 = por %p99, %p100
      %p102 = scmp.ne.s32.totalorder %s90, %s91
      %p103 = scmp.eq.s32.totalorder %s27, 3
      %p104 = por %p102, %p103
      %p106 = scmp.ne.s32.totalorder %s91, %s105
      %p107 = scmp.eq.s32.totalorder %s27, 0
      %p108 = por %p106, %p107
      %s110 = sadd.s32 %s109, 1
      %p113 = scmp.eq.s32.totalorder %s21, 3
      %p114 = scmp.ne.s32.totalorder %s109, %s111
      %p115 = scmp.eq.s32.totalorder %s21, 0
      %p116 = por %p114, %p115
      %p117 = scmp.ne.s32.totalorder %s109, %s111
      %p118 = scmp.eq.s32.totalorder %s26, 3
      %p119 = por %p117, %p118
      %p120 = scmp.ne.s32.totalorder %s111, %s112
      %p121 = scmp.eq.s32.totalorder %s26, 0
      %p122 = por %p120, %p121
      %p123 = scmp.ne.s32.totalorder %s111, %s112
      %p124 = scmp.eq.s32.totalorder %s27, 3
      %p125 = por %p123, %p124
      %p127 = scmp.ne.s32.totalorder %s112, %s126
      %p128 = scmp.eq.s32.totalorder %s27, 0
      %p129 = por %p127, %p128
      %s131 = sadd.s32 %s130, 1
      %p134 = scmp.eq.s32.totalorder %s21, 3
      %p135 = scmp.ne.s32.totalorder %s130, %s132
      %p136 = scmp.eq.s32.totalorder %s21, 0
      %p137 = por %p135, %p136
      %p138 = scmp.ne.s32.totalorder %s130, %s132
      %p139 = scmp.eq.s32.totalorder %s26, 3
      %p140 = por %p138, %p139
      %p141 = scmp.ne.s32.totalorder %s132, %s133
      %p142 = scmp.eq.s32.totalorder %s26, 0
      %p143 = por %p141, %p142
      %p144 = scmp.ne.s32.totalorder %s132, %s133
      %p145 = scmp.eq.s32.totalorder %s27, 3
      %p146 = por %p144, %p145
      %p148 = scmp.ne.s32.totalorder %s133, %s147
      %p149 = scmp.eq.s32.totalorder %s27, 0
      %p150 = por %p148, %p149
      %s152 = sadd.s32 %s151, 1
      %p155 = scmp.eq.s32.totalorder %s21, 3
      %p156 = scmp.ne.s32.totalorder %s151, %s153
      %p157 = scmp.eq.s32.totalorder %s21, 0
      %p158 = por %p156, %p157
      %p159 = scmp.ne.s32.totalorder %s151, %s153
      %p160 = scmp.eq.s32.totalorder %s26, 3
      %p161 = por %p159, %p160
      %p162 = scmp.ne.s32.totalorder %s153, %s154
      %p163 = scmp.eq.s32.totalorder %s26, 0
      %p164 = por %p162, %p163
      %p165 = scmp.ne.s32.totalorder %s153, %s154
      %p166 = scmp.eq.s32.totalorder %s27, 3
      %p167 = por %p165, %p166
      %p169 = scmp.ne.s32.totalorder %s154, %s168
      %p170 = scmp.eq.s32.totalorder %s27, 0
      %p171 = por %p169, %p170
      %s173 = sadd.s32 %s172, 1
      %p176 = scmp.eq.s32.totalorder %s21, 3
      %p177 = scmp.ne.s32.totalorder %s172, %s174
      %p178 = scmp.eq.s32.totalorder %s21, 0
      %p179 = por %p177, %p178
      %p180 = scmp.ne.s32.totalorder %s172, %s174
      %p181 = scmp.eq.s32.totalorder %s26, 3
      %p182 = por %p180, %p181
      %p183 = scmp.ne.s32.totalorder %s174, %s175
      %p184 = scmp.eq.s32.totalorder %s26, 0
      %p185 = por %p183, %p184
      %p186 = scmp.ne.s32.totalorder %s174, %s175
      %p187 = scmp.eq.s32.totalorder %s27, 3
      %p188 = por %p186, %p187
      %p190 = scmp.ne.s32.totalorder %s175, %s189
      %p191 = scmp.eq.s32.totalorder %s27, 0
      %p192 = por %p190, %p191
      %s193 = ssub.s32 %s28, %s40
      %s194 = ssub.s32 %s29, %s36
      %s195 = sor.u32 %s193, %s194
      %p196 = scmp.eq.s32.totalorder %s195, 0
      %s198 = sadd.s32 %s197, 1
      %s199 = scalar_select %p196, %s197, %s198
      %p202 = pneg %p196
      %p203 = scmp.eq.s32.totalorder %s21, 3
      %p204 = por %p202, %p203
      %p205 = scmp.ne.s32.totalorder %s197, %s200
      %p206 = scmp.eq.s32.totalorder %s21, 0
      %p207 = por %p205, %p206
      %p208 = scmp.ne.s32.totalorder %s197, %s200
      %p209 = scmp.eq.s32.totalorder %s26, 3
      %p210 = por %p208, %p209
      %p211 = scmp.ne.s32.totalorder %s200, %s201
      %p212 = scmp.eq.s32.totalorder %s26, 0
      %p213 = por %p211, %p212
      %p214 = scmp.ne.s32.totalorder %s200, %s201
      %p215 = scmp.eq.s32.totalorder %s27, 3
      %p216 = por %p214, %p215
      %p218 = scmp.ne.s32.totalorder %s201, %s217
      %p219 = scmp.eq.s32.totalorder %s27, 0
      %p220 = por %p218, %p219
      %p221 = scmp.le.s32.totalorder 1, %s21
      %p222 = scmp.lt.s32.totalorder %s21, 5
      %p223 = pnand %p221, %p222
      %p224 = pneg %p223
      // Predicated region
      $region9: #{tpu_custom_call.1} parent=5 // pred_check
        _
      $region10: #{tpu_custom_call.1} parent=5 // pred_check_branch
        %226 = sbr.rel (%p223) target = $region12
      $region11: #{tpu_custom_call.1} parent=5 // pred_region
        %s227 = ssub.s32 %s21, 1
        // Predicated region
        $region13: #{tpu_custom_call.1} parent=11 // pred_check
          %p228 = pneg %p80
        $region14: #{tpu_custom_call.1} parent=11 // pred_check_branch
          %230 = sbr.rel (%p228) target = $region16
        $region15: #{tpu_custom_call.1} parent=11 // pred_region
          %s232 = ssub.s32 2048, 2048
          %233 = vsyncadd [#allocation7], %s232
          %s234 = sshll.u32 [#allocation6], 4
          %s235 = int_to_ptr.vmem [resolvable:$true] %s234
          %240 = dma.hbm_to_vmem [thread:$0]  %s1, 2048, %s235, [#allocation7], 128, 128, 8
        $region16: #{tpu_custom_call.1} parent=11 // pred_fallthru
          _
        // Predicated region
        $region17: #{tpu_custom_call.1} parent=11 // pred_check
          %p241 = pneg %p101
        $region18: #{tpu_custom_call.1} parent=11 // pred_check_branch
          %243 = sbr.rel (%p241) target = $region20
        $region19: #{tpu_custom_call.1} parent=11 // pred_region
          _
        $region20: #{tpu_custom_call.1} parent=11 // pred_fallthru
          _
        // Predicated region
        $region21: #{tpu_custom_call.1} parent=11 // pred_check
          %p244 = pneg %p122
        $region22: #{tpu_custom_call.1} parent=11 // pred_check_branch
          %246 = sbr.rel (%p244) target = $region24
        $region23: #{tpu_custom_call.1} parent=11 // pred_region
          %s248 = ssub.s32 256, 256
          %249 = vsyncadd [#allocation7], %s248
          %s250 = sshll.u32 [#allocation8], 4
          %s251 = int_to_ptr.vmem [resolvable:$true] %s250
          %256 = dma.hbm_to_vmem [thread:$0]  %s3, 256, %s251, [#allocation7], 128, 128, 8
        $region24: #{tpu_custom_call.1} parent=11 // pred_fallthru
          _
        // Predicated region
        $region25: #{tpu_custom_call.1} parent=11 // pred_check
          %p257 = pneg %p143
        $region26: #{tpu_custom_call.1} parent=11 // pred_check_branch
          %259 = sbr.rel (%p257) target = $region28
        $region27: #{tpu_custom_call.1} parent=11 // pred_region
          _
        $region28: #{tpu_custom_call.1} parent=11 // pred_fallthru
          _
        // Predicated region
        $region29: #{tpu_custom_call.1} parent=11 // pred_check
          %p260 = pneg %p164
        $region30: #{tpu_custom_call.1} parent=11 // pred_check_branch
          %262 = sbr.rel (%p260) target = $region32
        $region31: #{tpu_custom_call.1} parent=11 // pred_region
          %s264 = ssub.s32 2048, 2048
          %265 = vsyncadd [#allocation10], %s264
          %s266 = sshll.u32 [#allocation9], 4
          %s267 = int_to_ptr.vmem [resolvable:$true] %s266
          %272 = dma.hbm_to_vmem [thread:$0]  %s5, 2048, %s267, [#allocation10], 128, 128, 8
        $region32: #{tpu_custom_call.1} parent=11 // pred_fallthru
          _
        // Predicated region
        $region33: #{tpu_custom_call.1} parent=11 // pred_check
          %p273 = pneg %p185
        $region34: #{tpu_custom_call.1} parent=11 // pred_check_branch
          %275 = sbr.rel (%p273) target = $region36
        $region35: #{tpu_custom_call.1} parent=11 // pred_region
          _
        $region36: #{tpu_custom_call.1} parent=11 // pred_fallthru
          _
      $region12: #{tpu_custom_call.1} parent=5 // pred_fallthru
        _
      %p276 = scmp.lt.s32.totalorder %s21, 4
      // Predicated region
      $region37: #{tpu_custom_call.1} parent=5 // pred_check
        %p277 = pneg %p276
      $region38: #{tpu_custom_call.1} parent=5 // pred_check_branch
        %279 = sbr.rel (%p277) target = $region40
      $region39: #{tpu_custom_call.1} parent=5 // pred_region
        // Predicated region
        $region41: #{tpu_custom_call.1} parent=39 // pred_check
          %p280 = pneg %p53
        $region42: #{tpu_custom_call.1} parent=39 // pred_check_branch
          %282 = sbr.rel (%p280) target = $region44
        $region43: #{tpu_custom_call.1} parent=39 // pred_region
          %s283 = sand.u32 %s43, 1
          %s284 = scalar_lea.sflag [#allocation4], %s283
          %s285 = sand.u32 %s43, 1
          %s286 = smul.addr %s285, 288
          %s287 = scalar_lea.vmem [#allocation3], %s286
          %s289 = ssub.s32 4608, 4608
          %290 = vsyncadd %s284, %s289
          %s291 = smul.addr %s28, 36
          %s292 = smul.addr %s291, 128
          %s293 = scalar_lea.hbm %s0, %s292
          %s294 = sshll.u32 %s287, 4
          %s295 = int_to_ptr.vmem [resolvable:$true] %s294
          %300 = dma.hbm_to_vmem [thread:$0]  %s293, 4608, %s295, %s284, 128, 128, 8
        $region44: #{tpu_custom_call.1} parent=39 // pred_fallthru
          _
      $region40: #{tpu_custom_call.1} parent=5 // pred_fallthru
        _
      %p301 = scmp.le.s32.totalorder 1, %s21
      %p302 = scmp.lt.s32.totalorder %s21, 5
      %p303 = pnand %p301, %p302
      %p304 = pneg %p303
      // Predicated region
      $region45: #{tpu_custom_call.1} parent=5 // pred_check
        _
      $region46: #{tpu_custom_call.1} parent=5 // pred_check_branch
        %306 = sbr.rel (%p303) target = $region48
      $region47: #{tpu_custom_call.1} parent=5 // pred_region
        %s307 = ssub.s32 %s21, 1
        %s308 = sand.u32 %s46, 1
        %s309 = scalar_lea.sflag [#allocation4], %s308
        %s310 = sand.u32 %s46, 1
        %s311 = smul.addr %s310, 288
        %s312 = scalar_lea.vmem [#allocation3], %s311
        // Predicated region
        $region49: #{tpu_custom_call.1} parent=47 // pred_check
          %p313 = pneg %p59
        $region50: #{tpu_custom_call.1} parent=47 // pred_check_branch
          %315 = sbr.rel (%p313) target = $region52
        $region51: #{tpu_custom_call.1} parent=47 // pred_region
          %316 = dma.done %s309, 4608
        $region52: #{tpu_custom_call.1} parent=47 // pred_fallthru
          _
        // Predicated region
        $region53: #{tpu_custom_call.1} parent=47 // pred_check
          %p317 = pneg %p80
        $region54: #{tpu_custom_call.1} parent=47 // pred_check_branch
          %319 = sbr.rel (%p317) target = $region56
        $region55: #{tpu_custom_call.1} parent=47 // pred_region
          %320 = dma.done [#allocation7], 2048
        $region56: #{tpu_custom_call.1} parent=47 // pred_fallthru
          _
        // Predicated region
        $region57: #{tpu_custom_call.1} parent=47 // pred_check
          %p321 = pneg %p122
        $region58: #{tpu_custom_call.1} parent=47 // pred_check_branch
          %323 = sbr.rel (%p321) target = $region60
        $region59: #{tpu_custom_call.1} parent=47 // pred_region
          %324 = dma.done [#allocation7], 256
        $region60: #{tpu_custom_call.1} parent=47 // pred_fallthru
          _
        // Predicated region
        $region61: #{tpu_custom_call.1} parent=47 // pred_check
          %p325 = pneg %p164
        $region62: #{tpu_custom_call.1} parent=47 // pred_check_branch
          %327 = sbr.rel (%p325) target = $region64
        $region63: #{tpu_custom_call.1} parent=47 // pred_region
          %328 = dma.done [#allocation10], 2048
        $region64: #{tpu_custom_call.1} parent=47 // pred_fallthru
          _
        %s329 = sand.u32 %s46, 1
        %s330 = scalar_lea.sflag [#allocation4], %s329
        %s331 = sand.u32 %s46, 1
        %s332 = smul.addr %s331, 288
        %s333 = scalar_lea.vmem [#allocation3], %s332
        %p334 = pneg %p59
        %p335 = pneg %p56
        %p336 = pneg %p80
        %p337 = pneg %p77
        %p338 = pneg %p101
        %p339 = pneg %p98
        %p340 = pneg %p122
        %p341 = pneg %p119
        %p342 = pneg %p143
        %p343 = pneg %p140
        %p344 = pneg %p164
        %p345 = pneg %p161
        %p346 = pneg %p185
        %p347 = pneg %p182
        %p348 = pneg %p213
        %p349 = pneg %p210
        %s350 = sand.u32 %s200, 1
        %s351 = scalar_lea.sflag [#allocation5], %s350
        %s352 = sand.u32 %s200, 1
        %s353 = smul.addr %s352, 128
        %s354 = scalar_lea.vmem [#allocation11], %s353
        %s355 = smul.u32 8, %s31
        %s356 = smul.u32 %s31, 8
        %s357 = smul.u32 %s356, 16
        %s358 = scalar_lea.vmem %s312, %s357 [#allocation3]
        %v359 = vld [vmem:[%s358] sm:$0xff]
        %v360 = vld [vmem:[%s358 + $0x8] sm:$0xff]
        %v361 = vld [vmem:[%s358 + $0x10] sm:$0xff]
        %v362 = vld [vmem:[%s358 + $0x18] sm:$0xff]
        %v363 = vld [vmem:[%s358 + $0x20] sm:$0xff]
        %v364 = vld [vmem:[%s358 + $0x28] sm:$0xff]
        %v365 = vld [vmem:[%s358 + $0x30] sm:$0xff]
        %v366 = vld [vmem:[%s358 + $0x38] sm:$0xff]
        %v367 = vld [vmem:[%s358 + $0x40] sm:$0xff]
        %v368 = vld [vmem:[%s358 + $0x48] sm:$0xff]
        %v369 = vld [vmem:[%s358 + $0x50] sm:$0xff]
        %v370 = vld [vmem:[%s358 + $0x58] sm:$0xff]
        %v371 = vld [vmem:[%s358 + $0x60] sm:$0xff]
        %v372 = vld [vmem:[%s358 + $0x68] sm:$0xff]
        %v373 = vld [vmem:[%s358 + $0x70] sm:$0xff]
        %v374 = vld [vmem:[%s358 + $0x78] sm:$0xff]
        %v375 = vld [vmem:[%s358 + $0x80] sm:$0xff]
        %v376 = vld [vmem:[%s358 + $0x88] sm:$0xff]
        %v377 = vld [vmem:[%s358 + $0x90] sm:$0xff]
        %v378 = vld [vmem:[%s358 + $0x98] sm:$0xff]
        %v379 = vld [vmem:[#allocation6] sm:$0xff]
        %v380 = vld [vmem:[#allocation6 + $0x8] sm:$0xff]
        %v381 = vld [vmem:[#allocation6 + $0x10] sm:$0xff]
        %v382 = vld [vmem:[#allocation6 + $0x18] sm:$0xff]
        %v383 = vld [vmem:[#allocation6 + $0x20] sm:$0xff]
        %v384 = vld [vmem:[#allocation6 + $0x28] sm:$0xff]
        %v385 = vld [vmem:[#allocation6 + $0x30] sm:$0xff]
        %v386 = vld [vmem:[#allocation6 + $0x38] sm:$0xff]
        %v387 = vld [vmem:[#allocation6 + $0x40] sm:$0xff]
        %v388 = vld [vmem:[#allocation6 + $0x48] sm:$0xff]
        %v389 = vld [vmem:[#allocation6 + $0x50] sm:$0xff]
        %v390 = vld [vmem:[#allocation6 + $0x58] sm:$0xff]
        %v391 = vld [vmem:[#allocation6 + $0x60] sm:$0xff]
        %v392 = vld [vmem:[#allocation6 + $0x68] sm:$0xff]
        %v393 = vld [vmem:[#allocation6 + $0x70] sm:$0xff]
        %v394 = vld [vmem:[#allocation6 + $0x78] sm:$0xff]
        %v395 = vld [vmem:[%s2] sm:$0x1]
        %v397 = vlaneseq
        %v398 = vshrl.u32 %v397, 7
        %v399 = vsub.s32 0, %v398
        %v400 = vrot.slane %v395, %v399
        %402 = vmatprep.subr.mxu0 0.0
        %403 = vmatpush1.msra.mxu0 %v394
        %404 = vmatprep.subr.mxu0 0.0
        %405 = vmatpush1.msra.mxu0 %v393
        %406 = vmatprep.subr.mxu0 0.0
        %407 = vmatpush1.msra.mxu0 %v392
        %408 = vmatprep.subr.mxu0 0.0
        %409 = vmatpush1.msra.mxu0 %v391
        %410 = vmatprep.subr.mxu0 0.0
        %411 = vmatpush1.msra.mxu0 %v390
        %412 = vmatprep.subr.mxu0 0.0
        %413 = vmatpush1.msra.mxu0 %v389
        %414 = vmatprep.subr.mxu0 0.0
        %415 = vmatpush1.msra.mxu0 %v388
        %416 = vmatprep.subr.mxu0 0.0
        %417 = vmatpush1.msra.mxu0 %v387
        %418 = vmatprep.subr.mxu0 0.0
        %419 = vmatpush1.msra.mxu0 %v386
        %420 = vmatprep.subr.mxu0 0.0
        %421 = vmatpush1.msra.mxu0 %v385
        %422 = vmatprep.subr.mxu0 0.0
        %423 = vmatpush1.msra.mxu0 %v384
        %424 = vmatprep.subr.mxu0 0.0
        %425 = vmatpush1.msra.mxu0 %v383
        %426 = vmatprep.subr.mxu0 0.0
        %427 = vmatpush1.msra.mxu0 %v382
        %428 = vmatprep.subr.mxu0 0.0
        %429 = vmatpush1.msra.mxu0 %v381
        %430 = vmatprep.subr.mxu0 0.0
        %431 = vmatpush1.msra.mxu0 %v380
        %432 = vmatprep.subr.mxu0 0.0
        %433 = vmatpush1.msra.mxu0 %v379
        %434 = vmatprep.subr.mxu0 0.0
        %435 = vmatpush2.msra.mxu0 0.0
        %436 = vmatprep.subr.mxu0 0.0
        %437 = vmatpush2.msra.mxu0 0.0
        %438 = vmatprep.subr.mxu0 0.0
        %439 = vmatpush2.msra.mxu0 0.0
        %440 = vmatprep.subr.mxu0 0.0
        %441 = vmatpush2.msra.mxu0 0.0
        %442 = vmatprep.subr.mxu0 0.0
        %443 = vmatpush2.msra.mxu0 0.0
        %444 = vmatprep.subr.mxu0 0.0
        %445 = vmatpush2.msra.mxu0 0.0
        %446 = vmatprep.subr.mxu0 0.0
        %447 = vmatpush2.msra.mxu0 0.0
        %448 = vmatprep.subr.mxu0 0.0
        %449 = vmatpush2.msra.mxu0 0.0
        %450 = vmatprep.subr.mxu0 0.0
        %451 = vmatpush2.msra.mxu0 0.0
        %452 = vmatprep.subr.mxu0 0.0
        %453 = vmatpush2.msra.mxu0 0.0
        %454 = vmatprep.subr.mxu0 0.0
        %455 = vmatpush2.msra.mxu0 0.0
        %456 = vmatprep.subr.mxu0 0.0
        %457 = vmatpush2.msra.mxu0 0.0
        %458 = vmatprep.subr.mxu0 0.0
        %459 = vmatpush2.msra.mxu0 0.0
        %460 = vmatprep.subr.mxu0 0.0
        %461 = vmatpush2.msra.mxu0 0.0
        %462 = vmatprep.subr.mxu0 0.0
        %463 = vmatpush2.msra.mxu0 0.0
        %464 = vmatprep.subr.mxu0 0.0
        %465 = vmatpush2.msra.mxu0 0.0
        %466 = vmatprep.mubr.f32.mxu0 0.0
        %467 = vmatmul.mubr.f32.gmra.mxu0 %v359
        %v468 = vpop.f32.mrf.mxu0
        %v469 = vadd.f32 %v400, %v468
        %v470 = vpop.f32.mrf.mxu0
        %471 = vmatprep.mubr.f32.mxu0 0.0
        %472 = vmatmul.mubr.f32.gmra.mxu0 %v360
        %v473 = vpop.f32.mrf.mxu0
        %v474 = vadd.f32 %v400, %v473
        %v475 = vpop.f32.mrf.mxu0
        %476 = vmatprep.mubr.f32.mxu0 0.0
        %477 = vmatmul.mubr.f32.gmra.mxu0 %v361
        %v478 = vpop.f32.mrf.mxu0
        %v479 = vadd.f32 %v400, %v478
        %v480 = vpop.f32.mrf.mxu0
        %481 = vmatprep.mubr.f32.mxu0 0.0
        %482 = vmatmul.mubr.f32.gmra.mxu0 %v362
        %v483 = vpop.f32.mrf.mxu0
        %v484 = vadd.f32 %v400, %v483
        %v485 = vpop.f32.mrf.mxu0
        %486 = vmatprep.mubr.f32.mxu0 0.0
        %487 = vmatmul.mubr.f32.gmra.mxu0 %v363
        %v488 = vpop.f32.mrf.mxu0
        %v489 = vadd.f32 %v400, %v488
        %v490 = vpop.f32.mrf.mxu0
        %491 = vmatprep.mubr.f32.mxu0 0.0
        %492 = vmatmul.mubr.f32.gmra.mxu0 %v364
        %v493 = vpop.f32.mrf.mxu0
        %v494 = vadd.f32 %v400, %v493
        %v495 = vpop.f32.mrf.mxu0
        %496 = vmatprep.mubr.f32.mxu0 0.0
        %497 = vmatmul.mubr.f32.gmra.mxu0 %v365
        %v498 = vpop.f32.mrf.mxu0
        %v499 = vadd.f32 %v400, %v498
        %v500 = vpop.f32.mrf.mxu0
        %501 = vmatprep.mubr.f32.mxu0 0.0
        %502 = vmatmul.mubr.f32.gmra.mxu0 %v366
        %v503 = vpop.f32.mrf.mxu0
        %v504 = vadd.f32 %v400, %v503
        %v505 = vpop.f32.mrf.mxu0
        %506 = vmatprep.mubr.f32.mxu0 0.0
        %507 = vmatmul.mubr.f32.gmra.mxu0 %v367
        %v508 = vpop.f32.mrf.mxu0
        %v509 = vadd.f32 %v400, %v508
        %v510 = vpop.f32.mrf.mxu0
        %511 = vmatprep.mubr.f32.mxu0 0.0
        %512 = vmatmul.mubr.f32.gmra.mxu0 %v368
        %v513 = vpop.f32.mrf.mxu0
        %v514 = vadd.f32 %v400, %v513
        %v515 = vpop.f32.mrf.mxu0
        %516 = vmatprep.mubr.f32.mxu0 0.0
        %517 = vmatmul.mubr.f32.gmra.mxu0 %v369
        %v518 = vpop.f32.mrf.mxu0
        %v519 = vadd.f32 %v400, %v518
        %v520 = vpop.f32.mrf.mxu0
        %521 = vmatprep.mubr.f32.mxu0 0.0
        %522 = vmatmul.mubr.f32.gmra.mxu0 %v370
        %v523 = vpop.f32.mrf.mxu0
        %v524 = vadd.f32 %v400, %v523
        %v525 = vpop.f32.mrf.mxu0
        %526 = vmatprep.mubr.f32.mxu0 0.0
        %527 = vmatmul.mubr.f32.gmra.mxu0 %v371
        %v528 = vpop.f32.mrf.mxu0
        %v529 = vadd.f32 %v400, %v528
        %v530 = vpop.f32.mrf.mxu0
        %531 = vmatprep.mubr.f32.mxu0 0.0
        %532 = vmatmul.mubr.f32.gmra.mxu0 %v372
        %v533 = vpop.f32.mrf.mxu0
        %v534 = vadd.f32 %v400, %v533
        %v535 = vpop.f32.mrf.mxu0
        %536 = vmatprep.mubr.f32.mxu0 0.0
        %537 = vmatmul.mubr.f32.gmra.mxu0 %v373
        %v538 = vpop.f32.mrf.mxu0
        %v539 = vadd.f32 %v400, %v538
        %v540 = vpop.f32.mrf.mxu0
        %541 = vmatprep.mubr.f32.mxu0 0.0
        %542 = vmatmul.mubr.f32.gmra.mxu0 %v374
        %v543 = vpop.f32.mrf.mxu0
        %v544 = vadd.f32 %v400, %v543
        %v545 = vpop.f32.mrf.mxu0
        %546 = vmatprep.mubr.f32.mxu0 0.0
        %547 = vmatmul.mubr.f32.gmra.mxu0 %v375
        %v548 = vpop.f32.mrf.mxu0
        %v549 = vadd.f32 %v400, %v548
        %v550 = vpop.f32.mrf.mxu0
        %551 = vmatprep.mubr.f32.mxu0 0.0
        %552 = vmatmul.mubr.f32.gmra.mxu0 %v376
        %v553 = vpop.f32.mrf.mxu0
        %v554 = vadd.f32 %v400, %v553
        %v555 = vpop.f32.mrf.mxu0
        %556 = vmatprep.mubr.f32.mxu0 0.0
        %557 = vmatmul.mubr.f32.gmra.mxu0 %v377
        %v558 = vpop.f32.mrf.mxu0
        %v559 = vadd.f32 %v400, %v558
        %v560 = vpop.f32.mrf.mxu0
        %561 = vmatprep.mubr.f32.mxu0 0.0
        %562 = vmatmul.mubr.f32.gmra.mxu0 %v378
        %v563 = vpop.f32.mrf.mxu0
        %v564 = vadd.f32 %v400, %v563
        %v565 = vpop.f32.mrf.mxu0
        %566 = vdwg.mxu0
        %v567 = vmax.f32 %v469, 0.0
        %v568 = vmax.f32 %v474, 0.0
        %v569 = vmax.f32 %v479, 0.0
        %v570 = vmax.f32 %v484, 0.0
        %v571 = vmax.f32 %v489, 0.0
        %v572 = vmax.f32 %v494, 0.0
        %v573 = vmax.f32 %v499, 0.0
        %v574 = vmax.f32 %v504, 0.0
        %v575 = vmax.f32 %v509, 0.0
        %v576 = vmax.f32 %v514, 0.0
        %v577 = vmax.f32 %v519, 0.0
        %v578 = vmax.f32 %v524, 0.0
        %v579 = vmax.f32 %v529, 0.0
        %v580 = vmax.f32 %v534, 0.0
        %v581 = vmax.f32 %v539, 0.0
        %v582 = vmax.f32 %v544, 0.0
        %v583 = vmax.f32 %v549, 0.0
        %v584 = vmax.f32 %v554, 0.0
        %v585 = vmax.f32 %v559, 0.0
        %v586 = vmax.f32 %v564, 0.0
        %v587 = vmin.f32 %v567, 6.0
        %v588 = vmin.f32 %v568, 6.0
        %v589 = vmin.f32 %v569, 6.0
        %v590 = vmin.f32 %v570, 6.0
        %v591 = vmin.f32 %v571, 6.0
        %v592 = vmin.f32 %v572, 6.0
        %v593 = vmin.f32 %v573, 6.0
        %v594 = vmin.f32 %v574, 6.0
        %v595 = vmin.f32 %v575, 6.0
        %v596 = vmin.f32 %v576, 6.0
        %v597 = vmin.f32 %v577, 6.0
        %v598 = vmin.f32 %v578, 6.0
        %v599 = vmin.f32 %v579, 6.0
        %v600 = vmin.f32 %v580, 6.0
        %v601 = vmin.f32 %v581, 6.0
        %v602 = vmin.f32 %v582, 6.0
        %v603 = vmin.f32 %v583, 6.0
        %v604 = vmin.f32 %v584, 6.0
        %v605 = vmin.f32 %v585, 6.0
        %v606 = vmin.f32 %v586, 6.0
        %vm627 = vcmask 1040384
        %v628 = vrot.slane %v587, 7
        %v629 = vrot.slane %v588, 7
        %v630 = vsel %vm627, %v628, %v629
        %v631 = vrot.slane %v589, 7
        %v632 = vrot.slane %v590, 7
        %v633 = vsel %vm627, %v631, %v632
        %v634 = vrot.slane %v591, 7
        %v635 = vrot.slane %v592, 7
        %v636 = vsel %vm627, %v634, %v635
        %v637 = vrot.slane %v593, 7
        %v638 = vrot.slane %v594, 7
        %v639 = vsel %vm627, %v637, %v638
        %v640 = vrot.slane %v595, 7
        %v641 = vrot.slane %v596, 7
        %v642 = vsel %vm627, %v640, %v641
        %v643 = vrot.slane %v597, 7
        %v644 = vrot.slane %v598, 7
        %v645 = vsel %vm627, %v643, %v644
        %v646 = vrot.slane %v599, 7
        %v647 = vrot.slane %v600, 7
        %v648 = vsel %vm627, %v646, %v647
        %v649 = vrot.slane %v601, 7
        %v650 = vrot.slane %v602, 7
        %v651 = vsel %vm627, %v649, %v650
        %v652 = vrot.slane %v603, 7
        %v653 = vrot.slane %v604, 7
        %v654 = vsel %vm627, %v652, %v653
        %v655 = vrot.slane %v605, 7
        %v656 = vrot.slane %v606, 7
        %v657 = vsel %vm627, %v655, %v656
        %v688 = vsel %vm627, 0.0, %v628
        %v689 = vsel %vm627, 0.0, %v631
        %v690 = vsel %vm627, 0.0, %v634
        %v691 = vsel %vm627, 0.0, %v637
        %v692 = vsel %vm627, 0.0, %v640
        %v693 = vsel %vm627, 0.0, %v643
        %v694 = vsel %vm627, 0.0, %v646
        %v695 = vsel %vm627, 0.0, %v649
        %v696 = vsel %vm627, 0.0, %v652
        %v697 = vsel %vm627, 0.0, %v655
        %v698 = vsel %vm627, %v629, 0.0
        %v699 = vsel %vm627, %v632, 0.0
        %v700 = vsel %vm627, %v635, 0.0
        %v701 = vsel %vm627, %v638, 0.0
        %v702 = vsel %vm627, %v641, 0.0
        %v703 = vsel %vm627, %v644, 0.0
        %v704 = vsel %vm627, %v647, 0.0
        %v705 = vsel %vm627, %v650, 0.0
        %v706 = vsel %vm627, %v653, 0.0
        %v707 = vsel %vm627, %v656, 0.0
        %708 = vst [vmem:[#allocation2] sm:$0xff] %v688
        %709 = vst [vmem:[#allocation2 + $0x8] sm:$0xff] %v630
        %710 = vst [vmem:[#allocation2 + $0x10] sm:$0x3] %v698
        %711 = vst [vmem:[#allocation2 + $0x18] sm:$0xff] %v689
        %712 = vst [vmem:[#allocation2 + $0x20] sm:$0xff] %v633
        %713 = vst [vmem:[#allocation2 + $0x28] sm:$0x3] %v699
        %714 = vst [vmem:[#allocation2 + $0x30] sm:$0xff] %v690
        %715 = vst [vmem:[#allocation2 + $0x38] sm:$0xff] %v636
        %716 = vst [vmem:[#allocation2 + $0x40] sm:$0x3] %v700
        %717 = vst [vmem:[#allocation2 + $0x48] sm:$0xff] %v691
        %718 = vst [vmem:[#allocation2 + $0x50] sm:$0xff] %v639
        %719 = vst [vmem:[#allocation2 + $0x58] sm:$0x3] %v701
        %720 = vst [vmem:[#allocation2 + $0x60] sm:$0xff] %v692
        %721 = vst [vmem:[#allocation2 + $0x68] sm:$0xff] %v642
        %722 = vst [vmem:[#allocation2 + $0x70] sm:$0x3] %v702
        %723 = vst [vmem:[#allocation2 + $0x78] sm:$0xff] %v693
        %724 = vst [vmem:[#allocation2 + $0x80] sm:$0xff] %v645
        %725 = vst [vmem:[#allocation2 + $0x88] sm:$0x3] %v703
        %726 = vst [vmem:[#allocation2 + $0x90] sm:$0xff] %v694
        %727 = vst [vmem:[#allocation2 + $0x98] sm:$0xff] %v648
        %728 = vst [vmem:[#allocation2 + $0xa0] sm:$0x3] %v704
        %729 = vst [vmem:[#allocation2 + $0xa8] sm:$0xff] %v695
        %730 = vst [vmem:[#allocation2 + $0xb0] sm:$0xff] %v651
        %731 = vst [vmem:[#allocation2 + $0xb8] sm:$0x3] %v705
        %732 = vst [vmem:[#allocation2 + $0xc0] sm:$0xff] %v696
        %733 = vst [vmem:[#allocation2 + $0xc8] sm:$0xff] %v654
        %734 = vst [vmem:[#allocation2 + $0xd0] sm:$0x3] %v706
        %735 = vst [vmem:[#allocation2 + $0xd8] sm:$0xff] %v697
        %736 = vst [vmem:[#allocation2 + $0xe0] sm:$0xff] %v657
        %737 = vst [vmem:[#allocation2 + $0xe8] sm:$0x3] %v707
        %p738 = scmp.eq.s32.totalorder %s356, 0
        // Predicated region
        $region65: #{tpu_custom_call.1} parent=47 // pred_check
          %p739 = pneg %p738
        $region66: #{tpu_custom_call.1} parent=47 // pred_check_branch
          %741 = sbr.rel (%p739) target = $region68
        $region67: #{tpu_custom_call.1} parent=47 // pred_region
          %742 = vst [vmem:[#allocation2] sm:$0xff] 0.0
          %743 = vst [vmem:[#allocation2 + $0x8] sm:$0xff] 0.0
          %744 = vst [vmem:[#allocation2 + $0x10] sm:$0x3] 0.0
        $region68: #{tpu_custom_call.1} parent=47 // pred_fallthru
          _
        %s745 = sadd.s32 %s356, 10
        %p746 = scmp.eq.s32.totalorder %s745, 18
        // Predicated region
        $region69: #{tpu_custom_call.1} parent=47 // pred_check
          %p747 = pneg %p746
        $region70: #{tpu_custom_call.1} parent=47 // pred_check_branch
          %749 = sbr.rel (%p747) target = $region72
        $region71: #{tpu_custom_call.1} parent=47 // pred_region
          %s750 = scalar_lea.vmem [#allocation2], 216
          %751 = vst [vmem:[%s750] sm:$0xff] 0.0
          %752 = vst [vmem:[%s750 + $0x8] sm:$0xff] 0.0
          %753 = vst [vmem:[%s750 + $0x10] sm:$0x3] 0.0
        $region72: #{tpu_custom_call.1} parent=47 // pred_fallthru
          _
        %v754 = vld [vmem:[#allocation8] sm:$0x1]
        %v755 = vld [vmem:[#allocation2] sm:$0xff]
        %v756 = vld [vmem:[#allocation2 + $0x8] sm:$0xff]
        %v757 = vld [vmem:[#allocation2 + $0x18] sm:$0xff]
        %v758 = vld [vmem:[#allocation2 + $0x20] sm:$0xff]
        %v759 = vld [vmem:[#allocation2 + $0x30] sm:$0xff]
        %v760 = vld [vmem:[#allocation2 + $0x38] sm:$0xff]
        %v761 = vld [vmem:[#allocation2 + $0x48] sm:$0xff]
        %v762 = vld [vmem:[#allocation2 + $0x50] sm:$0xff]
        %v763 = vld [vmem:[#allocation2 + $0x60] sm:$0xff]
        %v764 = vld [vmem:[#allocation2 + $0x68] sm:$0xff]
        %v765 = vld [vmem:[#allocation2 + $0x78] sm:$0xff]
        %v766 = vld [vmem:[#allocation2 + $0x80] sm:$0xff]
        %v767 = vld [vmem:[#allocation2 + $0x90] sm:$0xff]
        %v768 = vld [vmem:[#allocation2 + $0x98] sm:$0xff]
        %v769 = vld [vmem:[#allocation2 + $0xa8] sm:$0xff]
        %v770 = vld [vmem:[#allocation2 + $0xb0] sm:$0xff]
        %v771 = vlaneseq
        %v772 = vshrl.u32 %v771, 7
        %v773 = vsub.s32 0, %v772
        %v774 = vrot.slane %v754, %v773
        %v775 = vmul.f32 %v755, %v774
        %v776 = vmul.f32 %v756, %v774
        %v777 = vmul.f32 %v757, %v774
        %v778 = vmul.f32 %v758, %v774
        %v779 = vmul.f32 %v759, %v774
        %v780 = vmul.f32 %v760, %v774
        %v781 = vmul.f32 %v761, %v774
        %v782 = vmul.f32 %v762, %v774
        %v783 = vmul.f32 %v763, %v774
        %v784 = vmul.f32 %v764, %v774
        %v785 = vmul.f32 %v765, %v774
        %v786 = vmul.f32 %v766, %v774
        %v787 = vmul.f32 %v767, %v774
        %v788 = vmul.f32 %v768, %v774
        %v789 = vmul.f32 %v769, %v774
        %v790 = vmul.f32 %v770, %v774
        %v791 = vadd.f32 %v775, 0.0
        %v792 = vadd.f32 %v776, 0.0
        %v793 = vadd.f32 %v777, 0.0
        %v794 = vadd.f32 %v778, 0.0
        %v795 = vadd.f32 %v779, 0.0
        %v796 = vadd.f32 %v780, 0.0
        %v797 = vadd.f32 %v781, 0.0
        %v798 = vadd.f32 %v782, 0.0
        %v799 = vadd.f32 %v783, 0.0
        %v800 = vadd.f32 %v784, 0.0
        %v801 = vadd.f32 %v785, 0.0
        %v802 = vadd.f32 %v786, 0.0
        %v803 = vadd.f32 %v787, 0.0
        %v804 = vadd.f32 %v788, 0.0
        %v805 = vadd.f32 %v789, 0.0
        %v806 = vadd.f32 %v790, 0.0
        %v807 = vld [vmem:[#allocation8 + $0x1] sm:$0x1]
        %v808 = vld [vmem:[#allocation2 + $0x1] sm:$0xff]
        %v809 = vld [vmem:[#allocation2 + $0x9] sm:$0xff]
        %v810 = vld [vmem:[#allocation2 + $0x19] sm:$0xff]
        %v811 = vld [vmem:[#allocation2 + $0x21] sm:$0xff]
        %v812 = vld [vmem:[#allocation2 + $0x31] sm:$0xff]
        %v813 = vld [vmem:[#allocation2 + $0x39] sm:$0xff]
        %v814 = vld [vmem:[#allocation2 + $0x49] sm:$0xff]
        %v815 = vld [vmem:[#allocation2 + $0x51] sm:$0xff]
        %v816 = vld [vmem:[#allocation2 + $0x61] sm:$0xff]
        %v817 = vld [vmem:[#allocation2 + $0x69] sm:$0xff]
        %v818 = vld [vmem:[#allocation2 + $0x79] sm:$0xff]
        %v819 = vld [vmem:[#allocation2 + $0x81] sm:$0xff]
        %v820 = vld [vmem:[#allocation2 + $0x91] sm:$0xff]
        %v821 = vld [vmem:[#allocation2 + $0x99] sm:$0xff]
        %v822 = vld [vmem:[#allocation2 + $0xa9] sm:$0xff]
        %v823 = vld [vmem:[#allocation2 + $0xb1] sm:$0xff]
        %v824 = vlaneseq
        %v825 = vshrl.u32 %v824, 7
        %v826 = vsub.s32 0, %v825
        %v827 = vrot.slane %v807, %v826
        %v828 = vmul.f32 %v808, %v827
        %v829 = vmul.f32 %v809, %v827
        %v830 = vmul.f32 %v810, %v827
        %v831 = vmul.f32 %v811, %v827
        %v832 = vmul.f32 %v812, %v827
        %v833 = vmul.f32 %v813, %v827
        %v834 = vmul.f32 %v814, %v827
        %v835 = vmul.f32 %v815, %v827
        %v836 = vmul.f32 %v816, %v827
        %v837 = vmul.f32 %v817, %v827
        %v838 = vmul.f32 %v818, %v827
        %v839 = vmul.f32 %v819, %v827
        %v840 = vmul.f32 %v820, %v827
        %v841 = vmul.f32 %v821, %v827
        %v842 = vmul.f32 %v822, %v827
        %v843 = vmul.f32 %v823, %v827
        %v844 = vadd.f32 %v791, %v828
        %v845 = vadd.f32 %v792, %v829
        %v846 = vadd.f32 %v793, %v830
        %v847 = vadd.f32 %v794, %v831
        %v848 = vadd.f32 %v795, %v832
        %v849 = vadd.f32 %v796, %v833
        %v850 = vadd.f32 %v797, %v834
        %v851 = vadd.f32 %v798, %v835
        %v852 = vadd.f32 %v799, %v836
        %v853 = vadd.f32 %v800, %v837
        %v854 = vadd.f32 %v801, %v838
        %v855 = vadd.f32 %v802, %v839
        %v856 = vadd.f32 %v803, %v840
        %v857 = vadd.f32 %v804, %v841
        %v858 = vadd.f32 %v805, %v842
        %v859 = vadd.f32 %v806, %v843
        %v860 = vld [vmem:[#allocation8 + $0x2] sm:$0x1]
        %v861 = vld [vmem:[#allocation2 + $0x2] sm:$0xff]
        %v862 = vld [vmem:[#allocation2 + $0xa] sm:$0xff]
        %v863 = vld [vmem:[#allocation2 + $0x1a] sm:$0xff]
        %v864 = vld [vmem:[#allocation2 + $0x22] sm:$0xff]
        %v865 = vld [vmem:[#allocation2 + $0x32] sm:$0xff]
        %v866 = vld [vmem:[#allocation2 + $0x3a] sm:$0xff]
        %v867 = vld [vmem:[#allocation2 + $0x4a] sm:$0xff]
        %v868 = vld [vmem:[#allocation2 + $0x52] sm:$0xff]
        %v869 = vld [vmem:[#allocation2 + $0x62] sm:$0xff]
        %v870 = vld [vmem:[#allocation2 + $0x6a] sm:$0xff]
        %v871 = vld [vmem:[#allocation2 + $0x7a] sm:$0xff]
        %v872 = vld [vmem:[#allocation2 + $0x82] sm:$0xff]
        %v873 = vld [vmem:[#allocation2 + $0x92] sm:$0xff]
        %v874 = vld [vmem:[#allocation2 + $0x9a] sm:$0xff]
        %v875 = vld [vmem:[#allocation2 + $0xaa] sm:$0xff]
        %v876 = vld [vmem:[#allocation2 + $0xb2] sm:$0xff]
        %v877 = vlaneseq
        %v878 = vshrl.u32 %v877, 7
        %v879 = vsub.s32 0, %v878
        %v880 = vrot.slane %v860, %v879
        %v881 = vmul.f32 %v861, %v880
        %v882 = vmul.f32 %v862, %v880
        %v883 = vmul.f32 %v863, %v880
        %v884 = vmul.f32 %v864, %v880
        %v885 = vmul.f32 %v865, %v880
        %v886 = vmul.f32 %v866, %v880
        %v887 = vmul.f32 %v867, %v880
        %v888 = vmul.f32 %v868, %v880
        %v889 = vmul.f32 %v869, %v880
        %v890 = vmul.f32 %v870, %v880
        %v891 = vmul.f32 %v871, %v880
        %v892 = vmul.f32 %v872, %v880
        %v893 = vmul.f32 %v873, %v880
        %v894 = vmul.f32 %v874, %v880
        %v895 = vmul.f32 %v875, %v880
        %v896 = vmul.f32 %v876, %v880
        %v897 = vadd.f32 %v844, %v881
        %v898 = vadd.f32 %v845, %v882
        %v899 = vadd.f32 %v846, %v883
        %v900 = vadd.f32 %v847, %v884
        %v901 = vadd.f32 %v848, %v885
        %v902 = vadd.f32 %v849, %v886
        %v903 = vadd.f32 %v850, %v887
        %v904 = vadd.f32 %v851, %v888
        %v905 = vadd.f32 %v852, %v889
        %v906 = vadd.f32 %v853, %v890
        %v907 = vadd.f32 %v854, %v891
        %v908 = vadd.f32 %v855, %v892
        %v909 = vadd.f32 %v856, %v893
        %v910 = vadd.f32 %v857, %v894
        %v911 = vadd.f32 %v858, %v895
        %v912 = vadd.f32 %v859, %v896
        %v913 = vld [vmem:[#allocation8 + $0x3] sm:$0x1]
        %s914 = scalar_lea.vmem [#allocation2], 24
        %v915 = vld [vmem:[%s914] sm:$0xff]
        %v916 = vld [vmem:[%s914 + $0x8] sm:$0xff]
        %v917 = vld [vmem:[%s914 + $0x18] sm:$0xff]
        %v918 = vld [vmem:[%s914 + $0x20] sm:$0xff]
        %v919 = vld [vmem:[%s914 + $0x30] sm:$0xff]
        %v920 = vld [vmem:[%s914 + $0x38] sm:$0xff]
        %v921 = vld [vmem:[%s914 + $0x48] sm:$0xff]
        %v922 = vld [vmem:[%s914 + $0x50] sm:$0xff]
        %v923 = vld [vmem:[%s914 + $0x60] sm:$0xff]
        %v924 = vld [vmem:[%s914 + $0x68] sm:$0xff]
        %v925 = vld [vmem:[%s914 + $0x78] sm:$0xff]
        %v926 = vld [vmem:[%s914 + $0x80] sm:$0xff]
        %v927 = vld [vmem:[%s914 + $0x90] sm:$0xff]
        %v928 = vld [vmem:[%s914 + $0x98] sm:$0xff]
        %v929 = vld [vmem:[%s914 + $0xa8] sm:$0xff]
        %v930 = vld [vmem:[%s914 + $0xb0] sm:$0xff]
        %v931 = vlaneseq
        %v932 = vshrl.u32 %v931, 7
        %v933 = vsub.s32 0, %v932
        %v934 = vrot.slane %v913, %v933
        %v935 = vmul.f32 %v915, %v934
        %v936 = vmul.f32 %v916, %v934
        %v937 = vmul.f32 %v917, %v934
        %v938 = vmul.f32 %v918, %v934
        %v939 = vmul.f32 %v919, %v934
        %v940 = vmul.f32 %v920, %v934
        %v941 = vmul.f32 %v921, %v934
        %v942 = vmul.f32 %v922, %v934
        %v943 = vmul.f32 %v923, %v934
        %v944 = vmul.f32 %v924, %v934
        %v945 = vmul.f32 %v925, %v934
        %v946 = vmul.f32 %v926, %v934
        %v947 = vmul.f32 %v927, %v934
        %v948 = vmul.f32 %v928, %v934
        %v949 = vmul.f32 %v929, %v934
        %v950 = vmul.f32 %v930, %v934
        %v951 = vadd.f32 %v897, %v935
        %v952 = vadd.f32 %v898, %v936
        %v953 = vadd.f32 %v899, %v937
        %v954 = vadd.f32 %v900, %v938
        %v955 = vadd.f32 %v901, %v939
        %v956 = vadd.f32 %v902, %v940
        %v957 = vadd.f32 %v903, %v941
        %v958 = vadd.f32 %v904, %v942
        %v959 = vadd.f32 %v905, %v943
        %v960 = vadd.f32 %v906, %v944
        %v961 = vadd.f32 %v907, %v945
        %v962 = vadd.f32 %v908, %v946
        %v963 = vadd.f32 %v909, %v947
        %v964 = vadd.f32 %v910, %v948
        %v965 = vadd.f32 %v911, %v949
        %v966 = vadd.f32 %v912, %v950
        %v967 = vld [vmem:[#allocation8 + $0x4] sm:$0x1]
        %v968 = vld [vmem:[%s914 + $0x1] sm:$0xff]
        %v969 = vld [vmem:[%s914 + $0x9] sm:$0xff]
        %v970 = vld [vmem:[%s914 + $0x19] sm:$0xff]
        %v971 = vld [vmem:[%s914 + $0x21] sm:$0xff]
        %v972 = vld [vmem:[%s914 + $0x31] sm:$0xff]
        %v973 = vld [vmem:[%s914 + $0x39] sm:$0xff]
        %v974 = vld [vmem:[%s914 + $0x49] sm:$0xff]
        %v975 = vld [vmem:[%s914 + $0x51] sm:$0xff]
        %v976 = vld [vmem:[%s914 + $0x61] sm:$0xff]
        %v977 = vld [vmem:[%s914 + $0x69] sm:$0xff]
        %v978 = vld [vmem:[%s914 + $0x79] sm:$0xff]
        %v979 = vld [vmem:[%s914 + $0x81] sm:$0xff]
        %v980 = vld [vmem:[%s914 + $0x91] sm:$0xff]
        %v981 = vld [vmem:[%s914 + $0x99] sm:$0xff]
        %v982 = vld [vmem:[%s914 + $0xa9] sm:$0xff]
        %v983 = vld [vmem:[%s914 + $0xb1] sm:$0xff]
        %v984 = vlaneseq
        %v985 = vshrl.u32 %v984, 7
        %v986 = vsub.s32 0, %v985
        %v987 = vrot.slane %v967, %v986
        %v988 = vmul.f32 %v968, %v987
        %v989 = vmul.f32 %v969, %v987
        %v990 = vmul.f32 %v970, %v987
        %v991 = vmul.f32 %v971, %v987
        %v992 = vmul.f32 %v972, %v987
        %v993 = vmul.f32 %v973, %v987
        %v994 = vmul.f32 %v974, %v987
        %v995 = vmul.f32 %v975, %v987
        %v996 = vmul.f32 %v976, %v987
        %v997 = vmul.f32 %v977, %v987
        %v998 = vmul.f32 %v978, %v987
        %v999 = vmul.f32 %v979, %v987
        %v1000 = vmul.f32 %v980, %v987
        %v1001 = vmul.f32 %v981, %v987
        %v1002 = vmul.f32 %v982, %v987
        %v1003 = vmul.f32 %v983, %v987
        %v1004 = vadd.f32 %v951, %v988
        %v1005 = vadd.f32 %v952, %v989
        %v1006 = vadd.f32 %v953, %v990
        %v1007 = vadd.f32 %v954, %v991
        %v1008 = vadd.f32 %v955, %v992
        %v1009 = vadd.f32 %v956, %v993
        %v1010 = vadd.f32 %v957, %v994
        %v1011 = vadd.f32 %v958, %v995
        %v1012 = vadd.f32 %v959, %v996
        %v1013 = vadd.f32 %v960, %v997
        %v1014 = vadd.f32 %v961, %v998
        %v1015 = vadd.f32 %v962, %v999
        %v1016 = vadd.f32 %v963, %v1000
        %v1017 = vadd.f32 %v964, %v1001
        %v1018 = vadd.f32 %v965, %v1002
        %v1019 = vadd.f32 %v966, %v1003
        %v1020 = vld [vmem:[#allocation8 + $0x5] sm:$0x1]
        %v1021 = vld [vmem:[%s914 + $0x2] sm:$0xff]
        %v1022 = vld [vmem:[%s914 + $0xa] sm:$0xff]
        %v1023 = vld [vmem:[%s914 + $0x1a] sm:$0xff]
        %v1024 = vld [vmem:[%s914 + $0x22] sm:$0xff]
        %v1025 = vld [vmem:[%s914 + $0x32] sm:$0xff]
        %v1026 = vld [vmem:[%s914 + $0x3a] sm:$0xff]
        %v1027 = vld [vmem:[%s914 + $0x4a] sm:$0xff]
        %v1028 = vld [vmem:[%s914 + $0x52] sm:$0xff]
        %v1029 = vld [vmem:[%s914 + $0x62] sm:$0xff]
        %v1030 = vld [vmem:[%s914 + $0x6a] sm:$0xff]
        %v1031 = vld [vmem:[%s914 + $0x7a] sm:$0xff]
        %v1032 = vld [vmem:[%s914 + $0x82] sm:$0xff]
        %v1033 = vld [vmem:[%s914 + $0x92] sm:$0xff]
        %v1034 = vld [vmem:[%s914 + $0x9a] sm:$0xff]
        %v1035 = vld [vmem:[%s914 + $0xaa] sm:$0xff]
        %v1036 = vld [vmem:[%s914 + $0xb2] sm:$0xff]
        %v1037 = vlaneseq
        %v1038 = vshrl.u32 %v1037, 7
        %v1039 = vsub.s32 0, %v1038
        %v1040 = vrot.slane %v1020, %v1039
        %v1041 = vmul.f32 %v1021, %v1040
        %v1042 = vmul.f32 %v1022, %v1040
        %v1043 = vmul.f32 %v1023, %v1040
        %v1044 = vmul.f32 %v1024, %v1040
        %v1045 = vmul.f32 %v1025, %v1040
        %v1046 = vmul.f32 %v1026, %v1040
        %v1047 = vmul.f32 %v1027, %v1040
        %v1048 = vmul.f32 %v1028, %v1040
        %v1049 = vmul.f32 %v1029, %v1040
        %v1050 = vmul.f32 %v1030, %v1040
        %v1051 = vmul.f32 %v1031, %v1040
        %v1052 = vmul.f32 %v1032, %v1040
        %v1053 = vmul.f32 %v1033, %v1040
        %v1054 = vmul.f32 %v1034, %v1040
        %v1055 = vmul.f32 %v1035, %v1040
        %v1056 = vmul.f32 %v1036, %v1040
        %v1057 = vadd.f32 %v1004, %v1041
        %v1058 = vadd.f32 %v1005, %v1042
        %v1059 = vadd.f32 %v1006, %v1043
        %v1060 = vadd.f32 %v1007, %v1044
        %v1061 = vadd.f32 %v1008, %v1045
        %v1062 = vadd.f32 %v1009, %v1046
        %v1063 = vadd.f32 %v1010, %v1047
        %v1064 = vadd.f32 %v1011, %v1048
        %v1065 = vadd.f32 %v1012, %v1049
        %v1066 = vadd.f32 %v1013, %v1050
        %v1067 = vadd.f32 %v1014, %v1051
        %v1068 = vadd.f32 %v1015, %v1052
        %v1069 = vadd.f32 %v1016, %v1053
        %v1070 = vadd.f32 %v1017, %v1054
        %v1071 = vadd.f32 %v1018, %v1055
        %v1072 = vadd.f32 %v1019, %v1056
        %v1073 = vld [vmem:[#allocation8 + $0x6] sm:$0x1]
        %s1074 = scalar_lea.vmem [#allocation2], 48
        %v1075 = vld [vmem:[%s1074] sm:$0xff]
        %v1076 = vld [vmem:[%s1074 + $0x8] sm:$0xff]
        %v1077 = vld [vmem:[%s1074 + $0x18] sm:$0xff]
        %v1078 = vld [vmem:[%s1074 + $0x20] sm:$0xff]
        %v1079 = vld [vmem:[%s1074 + $0x30] sm:$0xff]
        %v1080 = vld [vmem:[%s1074 + $0x38] sm:$0xff]
        %v1081 = vld [vmem:[%s1074 + $0x48] sm:$0xff]
        %v1082 = vld [vmem:[%s1074 + $0x50] sm:$0xff]
        %v1083 = vld [vmem:[%s1074 + $0x60] sm:$0xff]
        %v1084 = vld [vmem:[%s1074 + $0x68] sm:$0xff]
        %v1085 = vld [vmem:[%s1074 + $0x78] sm:$0xff]
        %v1086 = vld [vmem:[%s1074 + $0x80] sm:$0xff]
        %v1087 = vld [vmem:[%s1074 + $0x90] sm:$0xff]
        %v1088 = vld [vmem:[%s1074 + $0x98] sm:$0xff]
        %v1089 = vld [vmem:[%s1074 + $0xa8] sm:$0xff]
        %v1090 = vld [vmem:[%s1074 + $0xb0] sm:$0xff]
        %v1091 = vlaneseq
        %v1092 = vshrl.u32 %v1091, 7
        %v1093 = vsub.s32 0, %v1092
        %v1094 = vrot.slane %v1073, %v1093
        %v1095 = vmul.f32 %v1075, %v1094
        %v1096 = vmul.f32 %v1076, %v1094
        %v1097 = vmul.f32 %v1077, %v1094
        %v1098 = vmul.f32 %v1078, %v1094
        %v1099 = vmul.f32 %v1079, %v1094
        %v1100 = vmul.f32 %v1080, %v1094
        %v1101 = vmul.f32 %v1081, %v1094
        %v1102 = vmul.f32 %v1082, %v1094
        %v1103 = vmul.f32 %v1083, %v1094
        %v1104 = vmul.f32 %v1084, %v1094
        %v1105 = vmul.f32 %v1085, %v1094
        %v1106 = vmul.f32 %v1086, %v1094
        %v1107 = vmul.f32 %v1087, %v1094
        %v1108 = vmul.f32 %v1088, %v1094
        %v1109 = vmul.f32 %v1089, %v1094
        %v1110 = vmul.f32 %v1090, %v1094
        %v1111 = vadd.f32 %v1057, %v1095
        %v1112 = vadd.f32 %v1058, %v1096
        %v1113 = vadd.f32 %v1059, %v1097
        %v1114 = vadd.f32 %v1060, %v1098
        %v1115 = vadd.f32 %v1061, %v1099
        %v1116 = vadd.f32 %v1062, %v1100
        %v1117 = vadd.f32 %v1063, %v1101
        %v1118 = vadd.f32 %v1064, %v1102
        %v1119 = vadd.f32 %v1065, %v1103
        %v1120 = vadd.f32 %v1066, %v1104
        %v1121 = vadd.f32 %v1067, %v1105
        %v1122 = vadd.f32 %v1068, %v1106
        %v1123 = vadd.f32 %v1069, %v1107
        %v1124 = vadd.f32 %v1070, %v1108
        %v1125 = vadd.f32 %v1071, %v1109
        %v1126 = vadd.f32 %v1072, %v1110
        %v1127 = vld [vmem:[#allocation8 + $0x7] sm:$0x1]
        %v1128 = vld [vmem:[%s1074 + $0x1] sm:$0xff]
        %v1129 = vld [vmem:[%s1074 + $0x9] sm:$0xff]
        %v1130 = vld [vmem:[%s1074 + $0x19] sm:$0xff]
        %v1131 = vld [vmem:[%s1074 + $0x21] sm:$0xff]
        %v1132 = vld [vmem:[%s1074 + $0x31] sm:$0xff]
        %v1133 = vld [vmem:[%s1074 + $0x39] sm:$0xff]
        %v1134 = vld [vmem:[%s1074 + $0x49] sm:$0xff]
        %v1135 = vld [vmem:[%s1074 + $0x51] sm:$0xff]
        %v1136 = vld [vmem:[%s1074 + $0x61] sm:$0xff]
        %v1137 = vld [vmem:[%s1074 + $0x69] sm:$0xff]
        %v1138 = vld [vmem:[%s1074 + $0x79] sm:$0xff]
        %v1139 = vld [vmem:[%s1074 + $0x81] sm:$0xff]
        %v1140 = vld [vmem:[%s1074 + $0x91] sm:$0xff]
        %v1141 = vld [vmem:[%s1074 + $0x99] sm:$0xff]
        %v1142 = vld [vmem:[%s1074 + $0xa9] sm:$0xff]
        %v1143 = vld [vmem:[%s1074 + $0xb1] sm:$0xff]
        %v1144 = vlaneseq
        %v1145 = vshrl.u32 %v1144, 7
        %v1146 = vsub.s32 0, %v1145
        %v1147 = vrot.slane %v1127, %v1146
        %v1148 = vmul.f32 %v1128, %v1147
        %v1149 = vmul.f32 %v1129, %v1147
        %v1150 = vmul.f32 %v1130, %v1147
        %v1151 = vmul.f32 %v1131, %v1147
        %v1152 = vmul.f32 %v1132, %v1147
        %v1153 = vmul.f32 %v1133, %v1147
        %v1154 = vmul.f32 %v1134, %v1147
        %v1155 = vmul.f32 %v1135, %v1147
        %v1156 = vmul.f32 %v1136, %v1147
        %v1157 = vmul.f32 %v1137, %v1147
        %v1158 = vmul.f32 %v1138, %v1147
        %v1159 = vmul.f32 %v1139, %v1147
        %v1160 = vmul.f32 %v1140, %v1147
        %v1161 = vmul.f32 %v1141, %v1147
        %v1162 = vmul.f32 %v1142, %v1147
        %v1163 = vmul.f32 %v1143, %v1147
        %v1164 = vadd.f32 %v1111, %v1148
        %v1165 = vadd.f32 %v1112, %v1149
        %v1166 = vadd.f32 %v1113, %v1150
        %v1167 = vadd.f32 %v1114, %v1151
        %v1168 = vadd.f32 %v1115, %v1152
        %v1169 = vadd.f32 %v1116, %v1153
        %v1170 = vadd.f32 %v1117, %v1154
        %v1171 = vadd.f32 %v1118, %v1155
        %v1172 = vadd.f32 %v1119, %v1156
        %v1173 = vadd.f32 %v1120, %v1157
        %v1174 = vadd.f32 %v1121, %v1158
        %v1175 = vadd.f32 %v1122, %v1159
        %v1176 = vadd.f32 %v1123, %v1160
        %v1177 = vadd.f32 %v1124, %v1161
        %v1178 = vadd.f32 %v1125, %v1162
        %v1179 = vadd.f32 %v1126, %v1163
        %v1180 = vld [vmem:[#allocation8 + $0x8] sm:$0x1]
        %v1181 = vld [vmem:[%s1074 + $0x2] sm:$0xff]
        %v1182 = vld [vmem:[%s1074 + $0xa] sm:$0xff]
        %v1183 = vld [vmem:[%s1074 + $0x1a] sm:$0xff]
        %v1184 = vld [vmem:[%s1074 + $0x22] sm:$0xff]
        %v1185 = vld [vmem:[%s1074 + $0x32] sm:$0xff]
        %v1186 = vld [vmem:[%s1074 + $0x3a] sm:$0xff]
        %v1187 = vld [vmem:[%s1074 + $0x4a] sm:$0xff]
        %v1188 = vld [vmem:[%s1074 + $0x52] sm:$0xff]
        %v1189 = vld [vmem:[%s1074 + $0x62] sm:$0xff]
        %v1190 = vld [vmem:[%s1074 + $0x6a] sm:$0xff]
        %v1191 = vld [vmem:[%s1074 + $0x7a] sm:$0xff]
        %v1192 = vld [vmem:[%s1074 + $0x82] sm:$0xff]
        %v1193 = vld [vmem:[%s1074 + $0x92] sm:$0xff]
        %v1194 = vld [vmem:[%s1074 + $0x9a] sm:$0xff]
        %v1195 = vld [vmem:[%s1074 + $0xaa] sm:$0xff]
        %v1196 = vld [vmem:[%s1074 + $0xb2] sm:$0xff]
        %v1197 = vlaneseq
        %v1198 = vshrl.u32 %v1197, 7
        %v1199 = vsub.s32 0, %v1198
        %v1200 = vrot.slane %v1180, %v1199
        %v1201 = vmul.f32 %v1181, %v1200
        %v1202 = vmul.f32 %v1182, %v1200
        %v1203 = vmul.f32 %v1183, %v1200
        %v1204 = vmul.f32 %v1184, %v1200
        %v1205 = vmul.f32 %v1185, %v1200
        %v1206 = vmul.f32 %v1186, %v1200
        %v1207 = vmul.f32 %v1187, %v1200
        %v1208 = vmul.f32 %v1188, %v1200
        %v1209 = vmul.f32 %v1189, %v1200
        %v1210 = vmul.f32 %v1190, %v1200
        %v1211 = vmul.f32 %v1191, %v1200
        %v1212 = vmul.f32 %v1192, %v1200
        %v1213 = vmul.f32 %v1193, %v1200
        %v1214 = vmul.f32 %v1194, %v1200
        %v1215 = vmul.f32 %v1195, %v1200
        %v1216 = vmul.f32 %v1196, %v1200
        %v1217 = vadd.f32 %v1164, %v1201
        %v1218 = vadd.f32 %v1165, %v1202
        %v1219 = vadd.f32 %v1166, %v1203
        %v1220 = vadd.f32 %v1167, %v1204
        %v1221 = vadd.f32 %v1168, %v1205
        %v1222 = vadd.f32 %v1169, %v1206
        %v1223 = vadd.f32 %v1170, %v1207
        %v1224 = vadd.f32 %v1171, %v1208
        %v1225 = vadd.f32 %v1172, %v1209
        %v1226 = vadd.f32 %v1173, %v1210
        %v1227 = vadd.f32 %v1174, %v1211
        %v1228 = vadd.f32 %v1175, %v1212
        %v1229 = vadd.f32 %v1176, %v1213
        %v1230 = vadd.f32 %v1177, %v1214
        %v1231 = vadd.f32 %v1178, %v1215
        %v1232 = vadd.f32 %v1179, %v1216
        %v1233 = vld [vmem:[%s4] sm:$0x1]
        %v1235 = vlaneseq
        %v1236 = vshrl.u32 %v1235, 7
        %v1237 = vsub.s32 0, %v1236
        %v1238 = vrot.slane %v1233, %v1237
        %v1240 = vadd.f32 %v1217, %v1238
        %v1241 = vadd.f32 %v1218, %v1238
        %v1242 = vadd.f32 %v1219, %v1238
        %v1243 = vadd.f32 %v1220, %v1238
        %v1244 = vadd.f32 %v1221, %v1238
        %v1245 = vadd.f32 %v1222, %v1238
        %v1246 = vadd.f32 %v1223, %v1238
        %v1247 = vadd.f32 %v1224, %v1238
        %v1248 = vadd.f32 %v1225, %v1238
        %v1249 = vadd.f32 %v1226, %v1238
        %v1250 = vadd.f32 %v1227, %v1238
        %v1251 = vadd.f32 %v1228, %v1238
        %v1252 = vadd.f32 %v1229, %v1238
        %v1253 = vadd.f32 %v1230, %v1238
        %v1254 = vadd.f32 %v1231, %v1238
        %v1255 = vadd.f32 %v1232, %v1238
        %v1256 = vmax.f32 %v1240, 0.0
        %v1257 = vmax.f32 %v1241, 0.0
        %v1258 = vmax.f32 %v1242, 0.0
        %v1259 = vmax.f32 %v1243, 0.0
        %v1260 = vmax.f32 %v1244, 0.0
        %v1261 = vmax.f32 %v1245, 0.0
        %v1262 = vmax.f32 %v1246, 0.0
        %v1263 = vmax.f32 %v1247, 0.0
        %v1264 = vmax.f32 %v1248, 0.0
        %v1265 = vmax.f32 %v1249, 0.0
        %v1266 = vmax.f32 %v1250, 0.0
        %v1267 = vmax.f32 %v1251, 0.0
        %v1268 = vmax.f32 %v1252, 0.0
        %v1269 = vmax.f32 %v1253, 0.0
        %v1270 = vmax.f32 %v1254, 0.0
        %v1271 = vmax.f32 %v1255, 0.0
        %v1272 = vmin.f32 %v1256, 6.0
        %v1273 = vmin.f32 %v1257, 6.0
        %v1274 = vmin.f32 %v1258, 6.0
        %v1275 = vmin.f32 %v1259, 6.0
        %v1276 = vmin.f32 %v1260, 6.0
        %v1277 = vmin.f32 %v1261, 6.0
        %v1278 = vmin.f32 %v1262, 6.0
        %v1279 = vmin.f32 %v1263, 6.0
        %v1280 = vmin.f32 %v1264, 6.0
        %v1281 = vmin.f32 %v1265, 6.0
        %v1282 = vmin.f32 %v1266, 6.0
        %v1283 = vmin.f32 %v1267, 6.0
        %v1284 = vmin.f32 %v1268, 6.0
        %v1285 = vmin.f32 %v1269, 6.0
        %v1286 = vmin.f32 %v1270, 6.0
        %v1287 = vmin.f32 %v1271, 6.0
        %v1288 = vld [vmem:[#allocation9] sm:$0xff]
        %v1289 = vld [vmem:[#allocation9 + $0x8] sm:$0xff]
        %v1290 = vld [vmem:[#allocation9 + $0x10] sm:$0xff]
        %v1291 = vld [vmem:[#allocation9 + $0x18] sm:$0xff]
        %v1292 = vld [vmem:[#allocation9 + $0x20] sm:$0xff]
        %v1293 = vld [vmem:[#allocation9 + $0x28] sm:$0xff]
        %v1294 = vld [vmem:[#allocation9 + $0x30] sm:$0xff]
        %v1295 = vld [vmem:[#allocation9 + $0x38] sm:$0xff]
        %v1296 = vld [vmem:[#allocation9 + $0x40] sm:$0xff]
        %v1297 = vld [vmem:[#allocation9 + $0x48] sm:$0xff]
        %v1298 = vld [vmem:[#allocation9 + $0x50] sm:$0xff]
        %v1299 = vld [vmem:[#allocation9 + $0x58] sm:$0xff]
        %v1300 = vld [vmem:[#allocation9 + $0x60] sm:$0xff]
        %v1301 = vld [vmem:[#allocation9 + $0x68] sm:$0xff]
        %v1302 = vld [vmem:[#allocation9 + $0x70] sm:$0xff]
        %v1303 = vld [vmem:[#allocation9 + $0x78] sm:$0xff]
        %v1304 = vld [vmem:[%s6] sm:$0x1]
        %v1306 = vlaneseq
        %v1307 = vshrl.u32 %v1306, 7
        %v1308 = vsub.s32 0, %v1307
        %v1309 = vrot.slane %v1304, %v1308
        %1311 = vmatprep.subr.mxu0 0.0
        %1312 = vmatpush1.msra.mxu0 %v1303
        %1313 = vmatprep.subr.mxu0 0.0
        %1314 = vmatpush1.msra.mxu0 %v1302
        %1315 = vmatprep.subr.mxu0 0.0
        %1316 = vmatpush1.msra.mxu0 %v1301
        %1317 = vmatprep.subr.mxu0 0.0
        %1318 = vmatpush1.msra.mxu0 %v1300
        %1319 = vmatprep.subr.mxu0 0.0
        %1320 = vmatpush1.msra.mxu0 %v1299
        %1321 = vmatprep.subr.mxu0 0.0
        %1322 = vmatpush1.msra.mxu0 %v1298
        %1323 = vmatprep.subr.mxu0 0.0
        %1324 = vmatpush1.msra.mxu0 %v1297
        %1325 = vmatprep.subr.mxu0 0.0
        %1326 = vmatpush1.msra.mxu0 %v1296
        %1327 = vmatprep.subr.mxu0 0.0
        %1328 = vmatpush1.msra.mxu0 %v1295
        %1329 = vmatprep.subr.mxu0 0.0
        %1330 = vmatpush1.msra.mxu0 %v1294
        %1331 = vmatprep.subr.mxu0 0.0
        %1332 = vmatpush1.msra.mxu0 %v1293
        %1333 = vmatprep.subr.mxu0 0.0
        %1334 = vmatpush1.msra.mxu0 %v1292
        %1335 = vmatprep.subr.mxu0 0.0
        %1336 = vmatpush1.msra.mxu0 %v1291
        %1337 = vmatprep.subr.mxu0 0.0
        %1338 = vmatpush1.msra.mxu0 %v1290
        %1339 = vmatprep.subr.mxu0 0.0
        %1340 = vmatpush1.msra.mxu0 %v1289
        %1341 = vmatprep.subr.mxu0 0.0
        %1342 = vmatpush1.msra.mxu0 %v1288
        %1343 = vmatprep.subr.mxu0 0.0
        %1344 = vmatpush2.msra.mxu0 0.0
        %1345 = vmatprep.subr.mxu0 0.0
        %1346 = vmatpush2.msra.mxu0 0.0
        %1347 = vmatprep.subr.mxu0 0.0
        %1348 = vmatpush2.msra.mxu0 0.0
        %1349 = vmatprep.subr.mxu0 0.0
        %1350 = vmatpush2.msra.mxu0 0.0
        %1351 = vmatprep.subr.mxu0 0.0
        %1352 = vmatpush2.msra.mxu0 0.0
        %1353 = vmatprep.subr.mxu0 0.0
        %1354 = vmatpush2.msra.mxu0 0.0
        %1355 = vmatprep.subr.mxu0 0.0
        %1356 = vmatpush2.msra.mxu0 0.0
        %1357 = vmatprep.subr.mxu0 0.0
        %1358 = vmatpush2.msra.mxu0 0.0
        %1359 = vmatprep.subr.mxu0 0.0
        %1360 = vmatpush2.msra.mxu0 0.0
        %1361 = vmatprep.subr.mxu0 0.0
        %1362 = vmatpush2.msra.mxu0 0.0
        %1363 = vmatprep.subr.mxu0 0.0
        %1364 = vmatpush2.msra.mxu0 0.0
        %1365 = vmatprep.subr.mxu0 0.0
        %1366 = vmatpush2.msra.mxu0 0.0
        %1367 = vmatprep.subr.mxu0 0.0
        %1368 = vmatpush2.msra.mxu0 0.0
        %1369 = vmatprep.subr.mxu0 0.0
        %1370 = vmatpush2.msra.mxu0 0.0
        %1371 = vmatprep.subr.mxu0 0.0
        %1372 = vmatpush2.msra.mxu0 0.0
        %1373 = vmatprep.subr.mxu0 0.0
        %1374 = vmatpush2.msra.mxu0 0.0
        %1375 = vmatprep.mubr.f32.mxu0 0.0
        %1376 = vmatmul.mubr.f32.gmra.mxu0 %v1272
        %v1377 = vpop.f32.mrf.mxu0
        %v1378 = vadd.f32 %v1309, %v1377
        %v1379 = vpop.f32.mrf.mxu0
        %1380 = vmatprep.mubr.f32.mxu0 0.0
        %1381 = vmatmul.mubr.f32.gmra.mxu0 %v1273
        %v1382 = vpop.f32.mrf.mxu0
        %v1383 = vadd.f32 %v1309, %v1382
        %v1384 = vpop.f32.mrf.mxu0
        %1385 = vmatprep.mubr.f32.mxu0 0.0
        %1386 = vmatmul.mubr.f32.gmra.mxu0 %v1274
        %v1387 = vpop.f32.mrf.mxu0
        %v1388 = vadd.f32 %v1309, %v1387
        %v1389 = vpop.f32.mrf.mxu0
        %1390 = vmatprep.mubr.f32.mxu0 0.0
        %1391 = vmatmul.mubr.f32.gmra.mxu0 %v1275
        %v1392 = vpop.f32.mrf.mxu0
        %v1393 = vadd.f32 %v1309, %v1392
        %v1394 = vpop.f32.mrf.mxu0
        %1395 = vmatprep.mubr.f32.mxu0 0.0
        %1396 = vmatmul.mubr.f32.gmra.mxu0 %v1276
        %v1397 = vpop.f32.mrf.mxu0
        %v1398 = vadd.f32 %v1309, %v1397
        %v1399 = vpop.f32.mrf.mxu0
        %1400 = vmatprep.mubr.f32.mxu0 0.0
        %1401 = vmatmul.mubr.f32.gmra.mxu0 %v1277
        %v1402 = vpop.f32.mrf.mxu0
        %v1403 = vadd.f32 %v1309, %v1402
        %v1404 = vpop.f32.mrf.mxu0
        %1405 = vmatprep.mubr.f32.mxu0 0.0
        %1406 = vmatmul.mubr.f32.gmra.mxu0 %v1278
        %v1407 = vpop.f32.mrf.mxu0
        %v1408 = vadd.f32 %v1309, %v1407
        %v1409 = vpop.f32.mrf.mxu0
        %1410 = vmatprep.mubr.f32.mxu0 0.0
        %1411 = vmatmul.mubr.f32.gmra.mxu0 %v1279
        %v1412 = vpop.f32.mrf.mxu0
        %v1413 = vadd.f32 %v1309, %v1412
        %v1414 = vpop.f32.mrf.mxu0
        %1415 = vmatprep.mubr.f32.mxu0 0.0
        %1416 = vmatmul.mubr.f32.gmra.mxu0 %v1280
        %v1417 = vpop.f32.mrf.mxu0
        %v1418 = vadd.f32 %v1309, %v1417
        %v1419 = vpop.f32.mrf.mxu0
        %1420 = vmatprep.mubr.f32.mxu0 0.0
        %1421 = vmatmul.mubr.f32.gmra.mxu0 %v1281
        %v1422 = vpop.f32.mrf.mxu0
        %v1423 = vadd.f32 %v1309, %v1422
        %v1424 = vpop.f32.mrf.mxu0
        %1425 = vmatprep.mubr.f32.mxu0 0.0
        %1426 = vmatmul.mubr.f32.gmra.mxu0 %v1282
        %v1427 = vpop.f32.mrf.mxu0
        %v1428 = vadd.f32 %v1309, %v1427
        %v1429 = vpop.f32.mrf.mxu0
        %1430 = vmatprep.mubr.f32.mxu0 0.0
        %1431 = vmatmul.mubr.f32.gmra.mxu0 %v1283
        %v1432 = vpop.f32.mrf.mxu0
        %v1433 = vadd.f32 %v1309, %v1432
        %v1434 = vpop.f32.mrf.mxu0
        %1435 = vmatprep.mubr.f32.mxu0 0.0
        %1436 = vmatmul.mubr.f32.gmra.mxu0 %v1284
        %v1437 = vpop.f32.mrf.mxu0
        %v1438 = vadd.f32 %v1309, %v1437
        %v1439 = vpop.f32.mrf.mxu0
        %1440 = vmatprep.mubr.f32.mxu0 0.0
        %1441 = vmatmul.mubr.f32.gmra.mxu0 %v1285
        %v1442 = vpop.f32.mrf.mxu0
        %v1443 = vadd.f32 %v1309, %v1442
        %v1444 = vpop.f32.mrf.mxu0
        %1445 = vmatprep.mubr.f32.mxu0 0.0
        %1446 = vmatmul.mubr.f32.gmra.mxu0 %v1286
        %v1447 = vpop.f32.mrf.mxu0
        %v1448 = vadd.f32 %v1309, %v1447
        %v1449 = vpop.f32.mrf.mxu0
        %1450 = vmatprep.mubr.f32.mxu0 0.0
        %1451 = vmatmul.mubr.f32.gmra.mxu0 %v1287
        %v1452 = vpop.f32.mrf.mxu0
        %v1453 = vadd.f32 %v1309, %v1452
        %v1454 = vpop.f32.mrf.mxu0
        %1455 = vdwg.mxu0
        %s1456 = sadd.s32 %s356, 1
        %s1457 = smul.u32 %s1456, 16
        %s1458 = scalar_lea.vmem %s312, %s1457 [#allocation3]
        %v1459 = vld [vmem:[%s1458] sm:$0xff]
        %v1460 = vld [vmem:[%s1458 + $0x8] sm:$0xff]
        %v1461 = vld [vmem:[%s1458 + $0x10] sm:$0xff]
        %v1462 = vld [vmem:[%s1458 + $0x18] sm:$0xff]
        %v1463 = vld [vmem:[%s1458 + $0x20] sm:$0xff]
        %v1464 = vld [vmem:[%s1458 + $0x28] sm:$0xff]
        %v1465 = vld [vmem:[%s1458 + $0x30] sm:$0xff]
        %v1466 = vld [vmem:[%s1458 + $0x38] sm:$0xff]
        %v1467 = vld [vmem:[%s1458 + $0x40] sm:$0xff]
        %v1468 = vld [vmem:[%s1458 + $0x48] sm:$0xff]
        %v1469 = vld [vmem:[%s1458 + $0x50] sm:$0xff]
        %v1470 = vld [vmem:[%s1458 + $0x58] sm:$0xff]
        %v1471 = vld [vmem:[%s1458 + $0x60] sm:$0xff]
        %v1472 = vld [vmem:[%s1458 + $0x68] sm:$0xff]
        %v1473 = vld [vmem:[%s1458 + $0x70] sm:$0xff]
        %v1474 = vld [vmem:[%s1458 + $0x78] sm:$0xff]
        %v1475 = vadd.f32 %v1378, %v1459
        %v1476 = vadd.f32 %v1383, %v1460
        %v1477 = vadd.f32 %v1388, %v1461
        %v1478 = vadd.f32 %v1393, %v1462
        %v1479 = vadd.f32 %v1398, %v1463
        %v1480 = vadd.f32 %v1403, %v1464
        %v1481 = vadd.f32 %v1408, %v1465
        %v1482 = vadd.f32 %v1413, %v1466
        %v1483 = vadd.f32 %v1418, %v1467
        %v1484 = vadd.f32 %v1423, %v1468
        %v1485 = vadd.f32 %v1428, %v1469
        %v1486 = vadd.f32 %v1433, %v1470
        %v1487 = vadd.f32 %v1438, %v1471
        %v1488 = vadd.f32 %v1443, %v1472
        %v1489 = vadd.f32 %v1448, %v1473
        %v1490 = vadd.f32 %v1453, %v1474
        %1491 = vst [vmem:[%s354] sm:$0xff] %v1475
        %1492 = vst [vmem:[%s354 + $0x8] sm:$0xff] %v1476
        %1493 = vst [vmem:[%s354 + $0x10] sm:$0xff] %v1477
        %1494 = vst [vmem:[%s354 + $0x18] sm:$0xff] %v1478
        %1495 = vst [vmem:[%s354 + $0x20] sm:$0xff] %v1479
        %1496 = vst [vmem:[%s354 + $0x28] sm:$0xff] %v1480
        %1497 = vst [vmem:[%s354 + $0x30] sm:$0xff] %v1481
        %1498 = vst [vmem:[%s354 + $0x38] sm:$0xff] %v1482
        %1499 = vst [vmem:[%s354 + $0x40] sm:$0xff] %v1483
        %1500 = vst [vmem:[%s354 + $0x48] sm:$0xff] %v1484
        %1501 = vst [vmem:[%s354 + $0x50] sm:$0xff] %v1485
        %1502 = vst [vmem:[%s354 + $0x58] sm:$0xff] %v1486
        %1503 = vst [vmem:[%s354 + $0x60] sm:$0xff] %v1487
        %1504 = vst [vmem:[%s354 + $0x68] sm:$0xff] %v1488
        %1505 = vst [vmem:[%s354 + $0x70] sm:$0xff] %v1489
        %1506 = vst [vmem:[%s354 + $0x78] sm:$0xff] %v1490
        %s1507 = sand.u32 %s200, 1
        %s1508 = scalar_lea.sflag [#allocation5], %s1507
        %s1509 = sand.u32 %s200, 1
        %s1510 = smul.addr %s1509, 128
        %s1511 = scalar_lea.vmem [#allocation11], %s1510
        // Predicated region
        $region73: #{tpu_custom_call.1} parent=47 // pred_check
          %p1512 = pneg %p210
        $region74: #{tpu_custom_call.1} parent=47 // pred_check_branch
          %1514 = sbr.rel (%p1512) target = $region76
        $region75: #{tpu_custom_call.1} parent=47 // pred_region
          %s1515 = smul.u32 8, %s31
          %s1517 = ssub.s32 2048, 2048
          %1518 = vsyncadd %s1508, %s1517
          %s1519 = smul.addr %s1515, 2
          %s1520 = smul.addr %s30, 32
          %s1521 = sadd.s32 %s1519, %s1520
          %s1522 = smul.addr %s1521, 128
          %s1523 = scalar_lea.hbm %s7, %s1522
          %s1524 = sshll.u32 %s1511, 4
          %s1525 = int_to_ptr.vmem [resolvable:$true] %s1524
          %1530 = dma.vmem_to_hbm [thread:$0]  %s1525, 2048, %s1523, %s1508, 128, 128, 8
        $region76: #{tpu_custom_call.1} parent=47 // pred_fallthru
          _
      $region48: #{tpu_custom_call.1} parent=5 // pred_fallthru
        _
      %p1531 = scmp.le.s32.totalorder 2, %s21
      // Predicated region
      $region77: #{tpu_custom_call.1} parent=5 // pred_check
        %p1532 = pneg %p1531
      $region78: #{tpu_custom_call.1} parent=5 // pred_check_branch
        %1534 = sbr.rel (%p1532) target = $region80
      $region79: #{tpu_custom_call.1} parent=5 // pred_region
        %s1535 = ssub.s32 %s21, 2
        // Predicated region
        $region81: #{tpu_custom_call.1} parent=79 // pred_check
          %p1536 = pneg %p216
        $region82: #{tpu_custom_call.1} parent=79 // pred_check_branch
          %1538 = sbr.rel (%p1536) target = $region84
        $region83: #{tpu_custom_call.1} parent=79 // pred_region
          %s1539 = sand.u32 %s201, 1
          %s1540 = scalar_lea.sflag [#allocation5], %s1539
          %s1541 = sand.u32 %s201, 1
          %s1542 = smul.addr %s1541, 128
          %s1543 = scalar_lea.vmem [#allocation11], %s1542
          %1544 = dma.done %s1540, 2048
        $region84: #{tpu_custom_call.1} parent=79 // pred_fallthru
          _
      $region80: #{tpu_custom_call.1} parent=5 // pred_fallthru
        _
    $region6: #{tpu_custom_call.1} parent=1 // loop_footer
      %s25 = sadd.s32 1, %s21
    $region7: #{tpu_custom_call.1} parent=1 // loop_footer_branch
      %20 = sbr.rel target = $region3
    $region8: #{tpu_custom_call.1} parent=1 // loop_exit
      _
    %1545 = vsyncpa [#allocation4], 1
    %s1546 = scalar_lea.sflag [#allocation4], 1
    %1547 = vsyncpa %s1546, 1
    %1548 = vsyncpa [#allocation7], 1
    %1549 = vsyncpa [#allocation10], 1
    %1550 = vsyncpa [#allocation5], 1
    %s1551 = scalar_lea.sflag [#allocation5], 1
    %1552 = vsyncpa %s1551, 1

</llo_original>
